<compile_context>
chip_gen: v5e
topology: v5e:2x2
jax: 0.10.0
libtpu: 0.0.40
codegen_flags: <defaults>
</compile_context>

<pallas_src>
import functools

import jax
import jax.numpy as jnp
import numpy as np
from jax.experimental import pallas as pl
from jax.experimental.pallas import tpu as pltpu


def _round_up(x, m):
    return ((x + m - 1) // m) * m


_TAPS = tuple((dh, dw) for dh in (-1, 0, 1) for dw in (-1, 0, 1))


# ---------------------------------------------------------------------------
# One-time parameter preparation (hoisted out of the per-forward path)
# ---------------------------------------------------------------------------
def _convt_weight_to_mat(w_t, cin_p, cout_p):
    """ConvTranspose2d weight (Cin, Cout, 3, 3) -> (cout_p, 9*cin_p) matmul weight.

    Row/col zero-padding to multiples of 8 keeps every in-kernel shape sublane
    aligned; the column order matches the im2col slab (tap-major, channel-minor).
    """
    cin, cout = w_t.shape[0], w_t.shape[1]
    w_conv = jnp.flip(w_t, axis=(2, 3)).transpose(1, 0, 2, 3)   # [co, ci, kh, kw]
    w_conv = jnp.transpose(w_conv, (0, 2, 3, 1))                # [co, kh, kw, ci]
    w_conv = jnp.pad(w_conv, ((0, cout_p - cout), (0, 0), (0, 0), (0, cin_p - cin)))
    return w_conv.reshape(cout_p, 9 * cin_p).astype(jnp.float32)


def _tap_masks(hh, ww):
    """(9, hh*ww) 0/1 mask zeroing the wrapped-around halo of each 3x3 tap."""
    hw = hh * ww
    h_idx = jnp.arange(hw) // ww
    w_idx = jnp.arange(hw) % ww
    rows = []
    for dh, dw in _TAPS:
        valid = ((h_idx + dh >= 0) & (h_idx + dh < hh) &
                 (w_idx + dw >= 0) & (w_idx + dw < ww))
        rows.append(valid.astype(jnp.float32))
    return jnp.stack(rows, axis=0)


def prepare_decode_block(params, H, W, eps=1e-5):
    """Fold weights / BN stats into MXU-friendly constants (run once)."""
    C = params["conv_b"].shape[0]
    C2 = params["conv_w"].shape[0]
    Cp = _round_up(C, 8)
    C2p = _round_up(C2, 8)
    HWs, HWb = H * W, 4 * H * W

    def padvec(v):
        return jnp.pad(v.astype(jnp.float32), (0, Cp - v.shape[0]))

    s1 = params["bn1_g"] / jnp.sqrt(params["bn1_v"] + eps)
    t1 = params["bn1_b"] - params["bn1_m"] * s1
    s2 = params["bn2_g"] / jnp.sqrt(params["bn2_v"] + eps)
    t2 = params["bn2_b"] - params["bn2_m"] * s2
    # Per-channel vectors packed into one (Cp, 8) array:
    #   [conv_b, bn1_scale, bn1_shift, dec1_b, bn2_scale, bn2_shift, dec2_b, 0]
    vecs = jnp.stack([padvec(params["conv_b"]), padvec(s1), padvec(t1),
                      padvec(params["dec1_b"]), padvec(s2), padvec(t2),
                      padvec(params["dec2_b"]), jnp.zeros((Cp,), jnp.float32)],
                     axis=1)

    # Nearest-neighbour x2 upsample as a constant (HWs, HWb) 0/1 matrix.
    q = jnp.arange(HWb)
    src = (q // (2 * W)) // 2 * W + (q % (2 * W)) // 2
    U = (src[None, :] == jnp.arange(HWs)[:, None]).astype(jnp.float32)

    return {
        "w1": _convt_weight_to_mat(params["conv_w"], C2p, Cp),
        "w2": _convt_weight_to_mat(params["dec1_w"], Cp, Cp),
        "w3": _convt_weight_to_mat(params["dec2_w"], Cp, Cp),
        "vecs": vecs,
        "U": U,
        "mask1": _tap_masks(H, W),           # (9, H*W)   masks for the small conv
        "maskb": _tap_masks(2 * H, 2 * W),   # (9, 4*H*W) masks for the big convs
        "C": C, "C2": C2, "Cp": Cp, "C2p": C2p, "H": H, "W": W,
    }


# ---------------------------------------------------------------------------
# Fused Pallas kernel
# ---------------------------------------------------------------------------
def _im2col(a, ww, mask9):
    """a: (Cin_p, L) activation (flattened spatial on lanes) -> (9*Cin_p, L) slab.

    Tap (dh, dw) of a 3x3 'same' conv is a lane roll by dh*ww+dw; mask9[t] is a
    (1, L) 0/1 row (sublane-broadcast) zeroing the wrapped-around border so the
    roll behaves like a zero halo.
    """
    taps = []
    for t, (dh, dw) in enumerate(_TAPS):
        d = dh * ww + dw
        r = a if d == 0 else jnp.roll(a, -d, axis=1)
        taps.append(r * mask9[t:t + 1, :])
    return jnp.concatenate(taps, axis=0)


def _decode_block_kernel(x_ref, c_ref, u_ref, m1_ref, mb_ref,
                         w1_ref, w2_ref, w3_ref, v_ref, o_ref,
                         *, B, Bc, W, HWb):
    v = v_ref[...]                                   # (Cp, 8) packed per-channel vectors
    b1, s1, t1 = v[:, 0:1], v[:, 1:2], v[:, 2:3]
    b2, s2, t2 = v[:, 3:4], v[:, 4:5], v[:, 5:6]
    b3 = v[:, 6:7]

    # Stage 1 -- rows [0, B): x -> ConvTranspose2d(2C->C, 3, pad=1) -> nearest x2
    # upsample (constant (HW, 4HW) 0/1 matmul).  Rows [B, B+Bc): the skip tensor
    # c (torch.cat along batch).  All rows are laid side by side on the lane axis.
    u, m1, w1 = u_ref[...], m1_ref[...], w1_ref[...]
    pieces = []
    for b in range(B):
        slab = _im2col(x_ref[b], W, m1)                                  # (9*C2p, HW)
        y = jnp.dot(w1, slab, preferred_element_type=jnp.float32) + b1   # (Cp, HW)
        pieces.append(jnp.dot(y, u, preferred_element_type=jnp.float32))  # (Cp, 4HW)
    for j in range(Bc):
        pieces.append(c_ref[j])
    h = jnp.concatenate(pieces, axis=1)                                   # (Cp, N*4HW)

    # Stage 2 -- decode_block: BN -> tanh -> Dropout2d(id, eval) -> ConvT -> BN
    # -> tanh -> Dropout2d(id, eval) -> ConvT, applied to ALL rows at once.
    # Correctness of rolling across row boundaries: a tap roll by d (|d|<=2W+1)
    # only pulls data from a neighbouring row segment at lanes whose spatial
    # neighbour (h+dh, w+dw) is out of the image -- exactly the lanes the halo
    # mask zeroes -- so no cross-row leakage survives the mask.
    mb = mb_ref[...]                                                      # (9, N*4HW)
    h = jnp.tanh(h * s1 + t1)
    h = jnp.dot(w2_ref[...], _im2col(h, 2 * W, mb),
                preferred_element_type=jnp.float32) + b2
    h = jnp.tanh(h * s2 + t2)
    h = jnp.dot(w3_ref[...], _im2col(h, 2 * W, mb),
                preferred_element_type=jnp.float32) + b3

    # Per-row, lane-aligned stores (static offsets, multiples of 4HW).
    for n in range(B + Bc):
        o_ref[n] = h[:, n * HWb:(n + 1) * HWb]


# ---------------------------------------------------------------------------
# Forward wrapper
# ---------------------------------------------------------------------------
def decode_block_forward(prepped, x_nchw, c_nchw):
    """x: (B, 2C, H, W), c: (Bc, C, 2H, 2W)  ->  (B+Bc, C, 2H, 2W)  (all NCHW)."""
    B, C2, H, W = x_nchw.shape
    Bc, C, H2, W2 = c_nchw.shape
    assert B >= 1 and Bc >= 1
    assert C2 == 2 * C and H2 == 2 * H and W2 == 2 * W
    assert prepped["H"] == H and prepped["W"] == W and prepped["C"] == C

    Cp, C2p = prepped["Cp"], prepped["C2p"]
    HWs, HWb = H * W, H2 * W2
    N = B + Bc

    # Free metadata reshapes into the (batch, channel, H*W) lane-dense layout;
    # channel zero-padding to a multiple of 8 (no-op when n_ch is already aligned).
    x = x_nchw.reshape(B, C2, HWs)
    c = c_nchw.reshape(Bc, C, HWb)
    if C2p > C2:
        x = jnp.pad(x, ((0, 0), (0, C2p - C2), (0, 0)))
    if Cp > C:
        c = jnp.pad(c, ((0, 0), (0, Cp - C), (0, 0)))

    # Stage-2 halo mask replicated once per batch row along the lane axis
    # (constant-folded under jit since `prepped` entries are closure constants).
    maskb_all = jnp.tile(prepped["maskb"], (1, N))        # (9, N*4HW)

    kernel = functools.partial(_decode_block_kernel, B=B, Bc=Bc, W=W, HWb=HWb)
    out = pl.pallas_call(
        kernel,
        out_shape=jax.ShapeDtypeStruct((N, Cp, HWb), jnp.float32),
        grid=(1,),
        in_specs=[
            pl.BlockSpec((B, C2p, HWs), lambda i: (0, 0, 0)),   # x rows
            pl.BlockSpec((Bc, Cp, HWb), lambda i: (0, 0, 0)),   # c rows
            pl.BlockSpec((HWs, HWb), lambda i: (0, 0)),         # upsample matrix
            pl.BlockSpec((9, HWs), lambda i: (0, 0)),           # halo masks, small conv
            pl.BlockSpec((9, N * HWb), lambda i: (0, 0)),       # halo masks, big convs
            pl.BlockSpec((Cp, 9 * C2p), lambda i: (0, 0)),      # conv weight
            pl.BlockSpec((Cp, 9 * Cp), lambda i: (0, 0)),       # dec1 weight
            pl.BlockSpec((Cp, 9 * Cp), lambda i: (0, 0)),       # dec2 weight
            pl.BlockSpec((Cp, 8), lambda i: (0, 0)),            # biases + BN scale/shift
        ],
        out_specs=pl.BlockSpec((N, Cp, HWb), lambda i: (0, 0, 0)),
        compiler_params=pltpu.CompilerParams(
            dimension_semantics=("arbitrary",)),
    )(x, c, prepped["U"], prepped["mask1"], maskb_all,
      prepped["w1"], prepped["w2"], prepped["w3"], prepped["vecs"])

    return out[:, :C, :].reshape(N, C, H2, W2)


# ---------------------------------------------------------------------------
# Pure-JAX reference (eval-mode semantics) for a numerical sanity check
# ---------------------------------------------------------------------------
def _ref_forward(params, x, c, eps=1e-5):
    def convt(inp, w_t, b):   # ConvTranspose2d(k=3, stride=1, padding=1)
        w_conv = jnp.flip(w_t, axis=(2, 3)).transpose(1, 0, 2, 3)  # (Cout, Cin, 3, 3)
        out = jax.lax.conv_general_dilated(
            inp, w_conv, window_strides=(1, 1), padding="SAME",
            dimension_numbers=("NCHW", "OIHW", "NCHW"),
            precision=jax.lax.Precision.HIGHEST)
        return out + b[None, :, None, None]

    def bn(inp, g, beta, m, v):
        s = g / jnp.sqrt(v + eps)
        return inp * s[None, :, None, None] + (beta - m * s)[None, :, None, None]

    y = convt(x, params["conv_w"], params["conv_b"])
    y = jnp.repeat(jnp.repeat(y, 2, axis=2), 2, axis=3)          # nearest x2
    y = jnp.concatenate([y, c], axis=0)                          # cat along batch
    y = jnp.tanh(bn(y, params["bn1_g"], params["bn1_b"], params["bn1_m"], params["bn1_v"]))
    y = convt(y, params["dec1_w"], params["dec1_b"])
    y = jnp.tanh(bn(y, params["bn2_g"], params["bn2_b"], params["bn2_m"], params["bn2_v"]))
    return convt(y, params["dec2_w"], params["dec2_b"])


# ---------------------------------------------------------------------------
# Parameter init (matches the PyTorch module's parameter set)
# ---------------------------------------------------------------------------
def init_decode_block_params(key, n_ch):
    ks = jax.random.split(key, 14)
    f32 = jnp.float32
    return {
        "conv_w": 0.1 * jax.random.normal(ks[0], (2 * n_ch, n_ch, 3, 3), f32),
        "conv_b": 0.1 * jax.random.normal(ks[1], (n_ch,), f32),
        "bn1_g": 1.0 + 0.1 * jax.random.normal(ks[2], (n_ch,), f32),
        "bn1_b": 0.1 * jax.random.normal(ks[3], (n_ch,), f32),
        "bn1_m": 0.1 * jax.random.normal(ks[4], (n_ch,), f32),
        "bn1_v": 1.0 + 0.1 * jnp.abs(jax.random.normal(ks[5], (n_ch,), f32)),
        "dec1_w": 0.1 * jax.random.normal(ks[6], (n_ch, n_ch, 3, 3), f32),
        "dec1_b": 0.1 * jax.random.normal(ks[7], (n_ch,), f32),
        "bn2_g": 1.0 + 0.1 * jax.random.normal(ks[8], (n_ch,), f32),
        "bn2_b": 0.1 * jax.random.normal(ks[9], (n_ch,), f32),
        "bn2_m": 0.1 * jax.random.normal(ks[10], (n_ch,), f32),
        "bn2_v": 1.0 + 0.1 * jnp.abs(jax.random.normal(ks[11], (n_ch,), f32)),
        "dec2_w": 0.1 * jax.random.normal(ks[12], (n_ch, n_ch, 3, 3), f32),
        "dec2_b": 0.1 * jax.random.normal(ks[13], (n_ch,), f32),
    }


if __name__ == "__main__":
    n_ch = 4
    B, Bc, H, W = 2, 2, 8, 8

    root = jax.random.PRNGKey(0)
    k_params, k_x, k_c = jax.random.split(root, 3)

    params = init_decode_block_params(k_params, n_ch)
    prepped = prepare_decode_block(params, H, W)

    x = jax.random.normal(k_x, (B, 2 * n_ch, H, W), jnp.float32)        # NCHW
    c = jax.random.normal(k_c, (Bc, n_ch, 2 * H, 2 * W), jnp.float32)   # NCHW

    fwd = jax.jit(lambda xx, cc: decode_block_forward(prepped, xx, cc))
    out = jax.block_until_ready(fwd(x, c))

    assert out.shape == (B + Bc, n_ch, 2 * H, 2 * W), out.shape
    assert out.dtype == jnp.float32
    assert bool(jnp.all(jnp.isfinite(out)))

    ref = jax.block_until_ready(_ref_forward(params, x, c))
    np.testing.assert_allclose(np.asarray(out), np.asarray(ref), rtol=5e-2, atol=5e-2)

    print("KERNEL_OK")
</pallas_src>

<mosaic_0001>
module attributes {stable_mosaic.version = 11 : i64} {
  func.func @_decode_block_kernel(%arg0: i32, %arg1: memref<2x8x64xf32, #tpu.memory_space<vmem>>, %arg2: memref<2x8x256xf32, #tpu.memory_space<vmem>>, %arg3: memref<64x256xf32, #tpu.memory_space<vmem>>, %arg4: memref<9x64xf32, #tpu.memory_space<vmem>>, %arg5: memref<9x1024xf32, #tpu.memory_space<vmem>>, %arg6: memref<8x72xf32, #tpu.memory_space<vmem>>, %arg7: memref<8x72xf32, #tpu.memory_space<vmem>>, %arg8: memref<8x72xf32, #tpu.memory_space<vmem>>, %arg9: memref<8x8xf32, #tpu.memory_space<vmem>>, %arg10: memref<4x8x256xf32, #tpu.memory_space<vmem>>) attributes {dimension_semantics = [#tpu.dimension_semantics<arbitrary>], iteration_bounds = array<i64: 1>, scalar_prefetch = 0 : i64, scratch_operands = 0 : i64, tpu.core_type = #tpu.core_type<tc>, window_params = [{pipeline_mode = #tpu.pipeline_mode<synchronous>, transform_indices = @transform_0, window_bounds = array<i64: 2, 8, 64>}, {pipeline_mode = #tpu.pipeline_mode<synchronous>, transform_indices = @transform_1, window_bounds = array<i64: 2, 8, 256>}, {pipeline_mode = #tpu.pipeline_mode<synchronous>, transform_indices = @transform_2, window_bounds = array<i64: 64, 256>}, {pipeline_mode = #tpu.pipeline_mode<synchronous>, transform_indices = @transform_3, window_bounds = array<i64: 9, 64>}, {pipeline_mode = #tpu.pipeline_mode<synchronous>, transform_indices = @transform_4, window_bounds = array<i64: 9, 1024>}, {pipeline_mode = #tpu.pipeline_mode<synchronous>, transform_indices = @transform_5, window_bounds = array<i64: 8, 72>}, {pipeline_mode = #tpu.pipeline_mode<synchronous>, transform_indices = @transform_6, window_bounds = array<i64: 8, 72>}, {pipeline_mode = #tpu.pipeline_mode<synchronous>, transform_indices = @transform_7, window_bounds = array<i64: 8, 72>}, {pipeline_mode = #tpu.pipeline_mode<synchronous>, transform_indices = @transform_8, window_bounds = array<i64: 8, 8>}, {pipeline_mode = #tpu.pipeline_mode<synchronous>, transform_indices = @transform_9, window_bounds = array<i64: 4, 8, 256>}]} {
    %c0 = arith.constant 0 : index
    %c0_0 = arith.constant 0 : index
    %0 = vector.load %arg9[%c0, %c0_0] : memref<8x8xf32, #tpu.memory_space<vmem>>, vector<8x8xf32>
    %1 = vector.extract_strided_slice %0 {offsets = [0, 0], sizes = [8, 1], strides = [1, 1]} : vector<8x8xf32> to vector<8x1xf32>
    %2 = vector.extract_strided_slice %0 {offsets = [0, 1], sizes = [8, 1], strides = [1, 1]} : vector<8x8xf32> to vector<8x1xf32>
    %3 = vector.extract_strided_slice %0 {offsets = [0, 2], sizes = [8, 1], strides = [1, 1]} : vector<8x8xf32> to vector<8x1xf32>
    %4 = vector.extract_strided_slice %0 {offsets = [0, 3], sizes = [8, 1], strides = [1, 1]} : vector<8x8xf32> to vector<8x1xf32>
    %5 = vector.extract_strided_slice %0 {offsets = [0, 4], sizes = [8, 1], strides = [1, 1]} : vector<8x8xf32> to vector<8x1xf32>
    %6 = vector.extract_strided_slice %0 {offsets = [0, 5], sizes = [8, 1], strides = [1, 1]} : vector<8x8xf32> to vector<8x1xf32>
    %7 = vector.extract_strided_slice %0 {offsets = [0, 6], sizes = [8, 1], strides = [1, 1]} : vector<8x8xf32> to vector<8x1xf32>
    %c0_1 = arith.constant 0 : index
    %c0_2 = arith.constant 0 : index
    %8 = vector.load %arg3[%c0_1, %c0_2] : memref<64x256xf32, #tpu.memory_space<vmem>>, vector<64x256xf32>
    %c0_3 = arith.constant 0 : index
    %c0_4 = arith.constant 0 : index
    %9 = vector.load %arg4[%c0_3, %c0_4] : memref<9x64xf32, #tpu.memory_space<vmem>>, vector<9x64xf32>
    %c0_5 = arith.constant 0 : index
    %c0_6 = arith.constant 0 : index
    %10 = vector.load %arg6[%c0_5, %c0_6] : memref<8x72xf32, #tpu.memory_space<vmem>>, vector<8x72xf32>
    %c0_7 = arith.constant 0 : index
    %c0_8 = arith.constant 0 : index
    %c0_9 = arith.constant 0 : index
    %11 = vector.load %arg1[%c0_7, %c0_8, %c0_9] : memref<2x8x64xf32, #tpu.memory_space<vmem>>, vector<1x8x64xf32>
    %12 = vector.shape_cast %11 : vector<1x8x64xf32> to vector<8x64xf32>
    %13 = vector.extract_strided_slice %12 {offsets = [0, 55], sizes = [8, 9], strides = [1, 1]} : vector<8x64xf32> to vector<8x9xf32>
    %14 = vector.extract_strided_slice %12 {offsets = [0, 0], sizes = [8, 55], strides = [1, 1]} : vector<8x64xf32> to vector<8x55xf32>
    %15 = tpu.concatenate %13, %14 in 1 : vector<8x9xf32>, vector<8x55xf32> -> vector<8x64xf32>
    %16 = vector.extract_strided_slice %9 {offsets = [0, 0], sizes = [1, 64], strides = [1, 1]} : vector<9x64xf32> to vector<1x64xf32>
    %17 = vector.broadcast %16 : vector<1x64xf32> to vector<8x64xf32>
    %18 = arith.mulf %15, %17 : vector<8x64xf32>
    %19 = vector.extract_strided_slice %12 {offsets = [0, 56], sizes = [8, 8], strides = [1, 1]} : vector<8x64xf32> to vector<8x8xf32>
    %20 = vector.extract_strided_slice %12 {offsets = [0, 0], sizes = [8, 56], strides = [1, 1]} : vector<8x64xf32> to vector<8x56xf32>
    %21 = tpu.concatenate %19, %20 in 1 : vector<8x8xf32>, vector<8x56xf32> -> vector<8x64xf32>
    %22 = vector.extract_strided_slice %9 {offsets = [1, 0], sizes = [1, 64], strides = [1, 1]} : vector<9x64xf32> to vector<1x64xf32>
    %23 = vector.broadcast %22 : vector<1x64xf32> to vector<8x64xf32>
    %24 = arith.mulf %21, %23 : vector<8x64xf32>
    %25 = vector.extract_strided_slice %12 {offsets = [0, 57], sizes = [8, 7], strides = [1, 1]} : vector<8x64xf32> to vector<8x7xf32>
    %26 = vector.extract_strided_slice %12 {offsets = [0, 0], sizes = [8, 57], strides = [1, 1]} : vector<8x64xf32> to vector<8x57xf32>
    %27 = tpu.concatenate %25, %26 in 1 : vector<8x7xf32>, vector<8x57xf32> -> vector<8x64xf32>
    %28 = vector.extract_strided_slice %9 {offsets = [2, 0], sizes = [1, 64], strides = [1, 1]} : vector<9x64xf32> to vector<1x64xf32>
    %29 = vector.broadcast %28 : vector<1x64xf32> to vector<8x64xf32>
    %30 = arith.mulf %27, %29 : vector<8x64xf32>
    %31 = vector.extract_strided_slice %12 {offsets = [0, 63], sizes = [8, 1], strides = [1, 1]} : vector<8x64xf32> to vector<8x1xf32>
    %32 = vector.extract_strided_slice %12 {offsets = [0, 0], sizes = [8, 63], strides = [1, 1]} : vector<8x64xf32> to vector<8x63xf32>
    %33 = tpu.concatenate %31, %32 in 1 : vector<8x1xf32>, vector<8x63xf32> -> vector<8x64xf32>
    %34 = vector.extract_strided_slice %9 {offsets = [3, 0], sizes = [1, 64], strides = [1, 1]} : vector<9x64xf32> to vector<1x64xf32>
    %35 = vector.broadcast %34 : vector<1x64xf32> to vector<8x64xf32>
    %36 = arith.mulf %33, %35 : vector<8x64xf32>
    %37 = vector.extract_strided_slice %9 {offsets = [4, 0], sizes = [1, 64], strides = [1, 1]} : vector<9x64xf32> to vector<1x64xf32>
    %38 = vector.broadcast %37 : vector<1x64xf32> to vector<8x64xf32>
    %39 = arith.mulf %12, %38 : vector<8x64xf32>
    %40 = vector.extract_strided_slice %12 {offsets = [0, 1], sizes = [8, 63], strides = [1, 1]} : vector<8x64xf32> to vector<8x63xf32>
    %41 = vector.extract_strided_slice %12 {offsets = [0, 0], sizes = [8, 1], strides = [1, 1]} : vector<8x64xf32> to vector<8x1xf32>
    %42 = tpu.concatenate %40, %41 in 1 : vector<8x63xf32>, vector<8x1xf32> -> vector<8x64xf32>
    %43 = vector.extract_strided_slice %9 {offsets = [5, 0], sizes = [1, 64], strides = [1, 1]} : vector<9x64xf32> to vector<1x64xf32>
    %44 = vector.broadcast %43 : vector<1x64xf32> to vector<8x64xf32>
    %45 = arith.mulf %42, %44 : vector<8x64xf32>
    %46 = vector.extract_strided_slice %12 {offsets = [0, 7], sizes = [8, 57], strides = [1, 1]} : vector<8x64xf32> to vector<8x57xf32>
    %47 = vector.extract_strided_slice %12 {offsets = [0, 0], sizes = [8, 7], strides = [1, 1]} : vector<8x64xf32> to vector<8x7xf32>
    %48 = tpu.concatenate %46, %47 in 1 : vector<8x57xf32>, vector<8x7xf32> -> vector<8x64xf32>
    %49 = vector.extract_strided_slice %9 {offsets = [6, 0], sizes = [1, 64], strides = [1, 1]} : vector<9x64xf32> to vector<1x64xf32>
    %50 = vector.broadcast %49 : vector<1x64xf32> to vector<8x64xf32>
    %51 = arith.mulf %48, %50 : vector<8x64xf32>
    %52 = vector.extract_strided_slice %12 {offsets = [0, 8], sizes = [8, 56], strides = [1, 1]} : vector<8x64xf32> to vector<8x56xf32>
    %53 = vector.extract_strided_slice %12 {offsets = [0, 0], sizes = [8, 8], strides = [1, 1]} : vector<8x64xf32> to vector<8x8xf32>
    %54 = tpu.concatenate %52, %53 in 1 : vector<8x56xf32>, vector<8x8xf32> -> vector<8x64xf32>
    %55 = vector.extract_strided_slice %9 {offsets = [7, 0], sizes = [1, 64], strides = [1, 1]} : vector<9x64xf32> to vector<1x64xf32>
    %56 = vector.broadcast %55 : vector<1x64xf32> to vector<8x64xf32>
    %57 = arith.mulf %54, %56 : vector<8x64xf32>
    %58 = vector.extract_strided_slice %12 {offsets = [0, 9], sizes = [8, 55], strides = [1, 1]} : vector<8x64xf32> to vector<8x55xf32>
    %59 = vector.extract_strided_slice %12 {offsets = [0, 0], sizes = [8, 9], strides = [1, 1]} : vector<8x64xf32> to vector<8x9xf32>
    %60 = tpu.concatenate %58, %59 in 1 : vector<8x55xf32>, vector<8x9xf32> -> vector<8x64xf32>
    %61 = vector.extract_strided_slice %9 {offsets = [8, 0], sizes = [1, 64], strides = [1, 1]} : vector<9x64xf32> to vector<1x64xf32>
    %62 = vector.broadcast %61 : vector<1x64xf32> to vector<8x64xf32>
    %63 = arith.mulf %60, %62 : vector<8x64xf32>
    %64 = tpu.concatenate %18, %24, %30, %36, %39, %45, %51, %57, %63 in 0 : vector<8x64xf32>, vector<8x64xf32>, vector<8x64xf32>, vector<8x64xf32>, vector<8x64xf32>, vector<8x64xf32>, vector<8x64xf32>, vector<8x64xf32>, vector<8x64xf32> -> vector<72x64xf32>
    %cst = arith.constant dense<0.000000e+00> : vector<8x64xf32>
    %65 = tpu.matmul %10, %64, %cst {dimension_numbers = #tpu.dot_dimension_numbers<[1], [0], [0], [1], [0, 0, 1, 1], [], []>} : vector<8x72xf32>, vector<72x64xf32>, vector<8x64xf32> -> vector<8x64xf32>
    %66 = vector.broadcast %1 : vector<8x1xf32> to vector<8x64xf32>
    %67 = arith.addf %65, %66 : vector<8x64xf32>
    %cst_10 = arith.constant dense<0.000000e+00> : vector<8x256xf32>
    %68 = tpu.matmul %67, %8, %cst_10 {dimension_numbers = #tpu.dot_dimension_numbers<[1], [0], [0], [1], [0, 0, 1, 1], [], []>} : vector<8x64xf32>, vector<64x256xf32>, vector<8x256xf32> -> vector<8x256xf32>
    %c1 = arith.constant 1 : index
    %c0_11 = arith.constant 0 : index
    %c0_12 = arith.constant 0 : index
    %69 = vector.load %arg1[%c1, %c0_11, %c0_12] : memref<2x8x64xf32, #tpu.memory_space<vmem>>, vector<1x8x64xf32>
    %70 = vector.shape_cast %69 : vector<1x8x64xf32> to vector<8x64xf32>
    %71 = vector.extract_strided_slice %70 {offsets = [0, 55], sizes = [8, 9], strides = [1, 1]} : vector<8x64xf32> to vector<8x9xf32>
    %72 = vector.extract_strided_slice %70 {offsets = [0, 0], sizes = [8, 55], strides = [1, 1]} : vector<8x64xf32> to vector<8x55xf32>
    %73 = tpu.concatenate %71, %72 in 1 : vector<8x9xf32>, vector<8x55xf32> -> vector<8x64xf32>
    %74 = vector.extract_strided_slice %9 {offsets = [0, 0], sizes = [1, 64], strides = [1, 1]} : vector<9x64xf32> to vector<1x64xf32>
    %75 = vector.broadcast %74 : vector<1x64xf32> to vector<8x64xf32>
    %76 = arith.mulf %73, %75 : vector<8x64xf32>
    %77 = vector.extract_strided_slice %70 {offsets = [0, 56], sizes = [8, 8], strides = [1, 1]} : vector<8x64xf32> to vector<8x8xf32>
    %78 = vector.extract_strided_slice %70 {offsets = [0, 0], sizes = [8, 56], strides = [1, 1]} : vector<8x64xf32> to vector<8x56xf32>
    %79 = tpu.concatenate %77, %78 in 1 : vector<8x8xf32>, vector<8x56xf32> -> vector<8x64xf32>
    %80 = vector.extract_strided_slice %9 {offsets = [1, 0], sizes = [1, 64], strides = [1, 1]} : vector<9x64xf32> to vector<1x64xf32>
    %81 = vector.broadcast %80 : vector<1x64xf32> to vector<8x64xf32>
    %82 = arith.mulf %79, %81 : vector<8x64xf32>
    %83 = vector.extract_strided_slice %70 {offsets = [0, 57], sizes = [8, 7], strides = [1, 1]} : vector<8x64xf32> to vector<8x7xf32>
    %84 = vector.extract_strided_slice %70 {offsets = [0, 0], sizes = [8, 57], strides = [1, 1]} : vector<8x64xf32> to vector<8x57xf32>
    %85 = tpu.concatenate %83, %84 in 1 : vector<8x7xf32>, vector<8x57xf32> -> vector<8x64xf32>
    %86 = vector.extract_strided_slice %9 {offsets = [2, 0], sizes = [1, 64], strides = [1, 1]} : vector<9x64xf32> to vector<1x64xf32>
    %87 = vector.broadcast %86 : vector<1x64xf32> to vector<8x64xf32>
    %88 = arith.mulf %85, %87 : vector<8x64xf32>
    %89 = vector.extract_strided_slice %70 {offsets = [0, 63], sizes = [8, 1], strides = [1, 1]} : vector<8x64xf32> to vector<8x1xf32>
    %90 = vector.extract_strided_slice %70 {offsets = [0, 0], sizes = [8, 63], strides = [1, 1]} : vector<8x64xf32> to vector<8x63xf32>
    %91 = tpu.concatenate %89, %90 in 1 : vector<8x1xf32>, vector<8x63xf32> -> vector<8x64xf32>
    %92 = vector.extract_strided_slice %9 {offsets = [3, 0], sizes = [1, 64], strides = [1, 1]} : vector<9x64xf32> to vector<1x64xf32>
    %93 = vector.broadcast %92 : vector<1x64xf32> to vector<8x64xf32>
    %94 = arith.mulf %91, %93 : vector<8x64xf32>
    %95 = vector.extract_strided_slice %9 {offsets = [4, 0], sizes = [1, 64], strides = [1, 1]} : vector<9x64xf32> to vector<1x64xf32>
    %96 = vector.broadcast %95 : vector<1x64xf32> to vector<8x64xf32>
    %97 = arith.mulf %70, %96 : vector<8x64xf32>
    %98 = vector.extract_strided_slice %70 {offsets = [0, 1], sizes = [8, 63], strides = [1, 1]} : vector<8x64xf32> to vector<8x63xf32>
    %99 = vector.extract_strided_slice %70 {offsets = [0, 0], sizes = [8, 1], strides = [1, 1]} : vector<8x64xf32> to vector<8x1xf32>
    %100 = tpu.concatenate %98, %99 in 1 : vector<8x63xf32>, vector<8x1xf32> -> vector<8x64xf32>
    %101 = vector.extract_strided_slice %9 {offsets = [5, 0], sizes = [1, 64], strides = [1, 1]} : vector<9x64xf32> to vector<1x64xf32>
    %102 = vector.broadcast %101 : vector<1x64xf32> to vector<8x64xf32>
    %103 = arith.mulf %100, %102 : vector<8x64xf32>
    %104 = vector.extract_strided_slice %70 {offsets = [0, 7], sizes = [8, 57], strides = [1, 1]} : vector<8x64xf32> to vector<8x57xf32>
    %105 = vector.extract_strided_slice %70 {offsets = [0, 0], sizes = [8, 7], strides = [1, 1]} : vector<8x64xf32> to vector<8x7xf32>
    %106 = tpu.concatenate %104, %105 in 1 : vector<8x57xf32>, vector<8x7xf32> -> vector<8x64xf32>
    %107 = vector.extract_strided_slice %9 {offsets = [6, 0], sizes = [1, 64], strides = [1, 1]} : vector<9x64xf32> to vector<1x64xf32>
    %108 = vector.broadcast %107 : vector<1x64xf32> to vector<8x64xf32>
    %109 = arith.mulf %106, %108 : vector<8x64xf32>
    %110 = vector.extract_strided_slice %70 {offsets = [0, 8], sizes = [8, 56], strides = [1, 1]} : vector<8x64xf32> to vector<8x56xf32>
    %111 = vector.extract_strided_slice %70 {offsets = [0, 0], sizes = [8, 8], strides = [1, 1]} : vector<8x64xf32> to vector<8x8xf32>
    %112 = tpu.concatenate %110, %111 in 1 : vector<8x56xf32>, vector<8x8xf32> -> vector<8x64xf32>
    %113 = vector.extract_strided_slice %9 {offsets = [7, 0], sizes = [1, 64], strides = [1, 1]} : vector<9x64xf32> to vector<1x64xf32>
    %114 = vector.broadcast %113 : vector<1x64xf32> to vector<8x64xf32>
    %115 = arith.mulf %112, %114 : vector<8x64xf32>
    %116 = vector.extract_strided_slice %70 {offsets = [0, 9], sizes = [8, 55], strides = [1, 1]} : vector<8x64xf32> to vector<8x55xf32>
    %117 = vector.extract_strided_slice %70 {offsets = [0, 0], sizes = [8, 9], strides = [1, 1]} : vector<8x64xf32> to vector<8x9xf32>
    %118 = tpu.concatenate %116, %117 in 1 : vector<8x55xf32>, vector<8x9xf32> -> vector<8x64xf32>
    %119 = vector.extract_strided_slice %9 {offsets = [8, 0], sizes = [1, 64], strides = [1, 1]} : vector<9x64xf32> to vector<1x64xf32>
    %120 = vector.broadcast %119 : vector<1x64xf32> to vector<8x64xf32>
    %121 = arith.mulf %118, %120 : vector<8x64xf32>
    %122 = tpu.concatenate %76, %82, %88, %94, %97, %103, %109, %115, %121 in 0 : vector<8x64xf32>, vector<8x64xf32>, vector<8x64xf32>, vector<8x64xf32>, vector<8x64xf32>, vector<8x64xf32>, vector<8x64xf32>, vector<8x64xf32>, vector<8x64xf32> -> vector<72x64xf32>
    %cst_13 = arith.constant dense<0.000000e+00> : vector<8x64xf32>
    %123 = tpu.matmul %10, %122, %cst_13 {dimension_numbers = #tpu.dot_dimension_numbers<[1], [0], [0], [1], [0, 0, 1, 1], [], []>} : vector<8x72xf32>, vector<72x64xf32>, vector<8x64xf32> -> vector<8x64xf32>
    %124 = vector.broadcast %1 : vector<8x1xf32> to vector<8x64xf32>
    %125 = arith.addf %123, %124 : vector<8x64xf32>
    %cst_14 = arith.constant dense<0.000000e+00> : vector<8x256xf32>
    %126 = tpu.matmul %125, %8, %cst_14 {dimension_numbers = #tpu.dot_dimension_numbers<[1], [0], [0], [1], [0, 0, 1, 1], [], []>} : vector<8x64xf32>, vector<64x256xf32>, vector<8x256xf32> -> vector<8x256xf32>
    %c0_15 = arith.constant 0 : index
    %c0_16 = arith.constant 0 : index
    %c0_17 = arith.constant 0 : index
    %127 = vector.load %arg2[%c0_15, %c0_16, %c0_17] : memref<2x8x256xf32, #tpu.memory_space<vmem>>, vector<1x8x256xf32>
    %128 = vector.shape_cast %127 : vector<1x8x256xf32> to vector<8x256xf32>
    %c1_18 = arith.constant 1 : index
    %c0_19 = arith.constant 0 : index
    %c0_20 = arith.constant 0 : index
    %129 = vector.load %arg2[%c1_18, %c0_19, %c0_20] : memref<2x8x256xf32, #tpu.memory_space<vmem>>, vector<1x8x256xf32>
    %130 = vector.shape_cast %129 : vector<1x8x256xf32> to vector<8x256xf32>
    %131 = tpu.concatenate %68, %126, %128, %130 in 1 : vector<8x256xf32>, vector<8x256xf32>, vector<8x256xf32>, vector<8x256xf32> -> vector<8x1024xf32>
    %c0_21 = arith.constant 0 : index
    %c0_22 = arith.constant 0 : index
    %132 = vector.load %arg5[%c0_21, %c0_22] : memref<9x1024xf32, #tpu.memory_space<vmem>>, vector<9x1024xf32>
    %133 = vector.broadcast %2 : vector<8x1xf32> to vector<8x1024xf32>
    %134 = arith.mulf %131, %133 : vector<8x1024xf32>
    %135 = vector.broadcast %3 : vector<8x1xf32> to vector<8x1024xf32>
    %136 = arith.addf %134, %135 : vector<8x1024xf32>
    %137 = math.tanh %136 : vector<8x1024xf32>
    %c0_23 = arith.constant 0 : index
    %c0_24 = arith.constant 0 : index
    %138 = vector.load %arg7[%c0_23, %c0_24] : memref<8x72xf32, #tpu.memory_space<vmem>>, vector<8x72xf32>
    %139 = vector.extract_strided_slice %137 {offsets = [0, 1007], sizes = [8, 17], strides = [1, 1]} : vector<8x1024xf32> to vector<8x17xf32>
    %140 = vector.extract_strided_slice %137 {offsets = [0, 0], sizes = [8, 1007], strides = [1, 1]} : vector<8x1024xf32> to vector<8x1007xf32>
    %141 = tpu.concatenate %139, %140 in 1 : vector<8x17xf32>, vector<8x1007xf32> -> vector<8x1024xf32>
    %142 = vector.extract_strided_slice %132 {offsets = [0, 0], sizes = [1, 1024], strides = [1, 1]} : vector<9x1024xf32> to vector<1x1024xf32>
    %143 = vector.broadcast %142 : vector<1x1024xf32> to vector<8x1024xf32>
    %144 = arith.mulf %141, %143 : vector<8x1024xf32>
    %145 = vector.extract_strided_slice %137 {offsets = [0, 1008], sizes = [8, 16], strides = [1, 1]} : vector<8x1024xf32> to vector<8x16xf32>
    %146 = vector.extract_strided_slice %137 {offsets = [0, 0], sizes = [8, 1008], strides = [1, 1]} : vector<8x1024xf32> to vector<8x1008xf32>
    %147 = tpu.concatenate %145, %146 in 1 : vector<8x16xf32>, vector<8x1008xf32> -> vector<8x1024xf32>
    %148 = vector.extract_strided_slice %132 {offsets = [1, 0], sizes = [1, 1024], strides = [1, 1]} : vector<9x1024xf32> to vector<1x1024xf32>
    %149 = vector.broadcast %148 : vector<1x1024xf32> to vector<8x1024xf32>
    %150 = arith.mulf %147, %149 : vector<8x1024xf32>
    %151 = vector.extract_strided_slice %137 {offsets = [0, 1009], sizes = [8, 15], strides = [1, 1]} : vector<8x1024xf32> to vector<8x15xf32>
    %152 = vector.extract_strided_slice %137 {offsets = [0, 0], sizes = [8, 1009], strides = [1, 1]} : vector<8x1024xf32> to vector<8x1009xf32>
    %153 = tpu.concatenate %151, %152 in 1 : vector<8x15xf32>, vector<8x1009xf32> -> vector<8x1024xf32>
    %154 = vector.extract_strided_slice %132 {offsets = [2, 0], sizes = [1, 1024], strides = [1, 1]} : vector<9x1024xf32> to vector<1x1024xf32>
    %155 = vector.broadcast %154 : vector<1x1024xf32> to vector<8x1024xf32>
    %156 = arith.mulf %153, %155 : vector<8x1024xf32>
    %157 = vector.extract_strided_slice %137 {offsets = [0, 1023], sizes = [8, 1], strides = [1, 1]} : vector<8x1024xf32> to vector<8x1xf32>
    %158 = vector.extract_strided_slice %137 {offsets = [0, 0], sizes = [8, 1023], strides = [1, 1]} : vector<8x1024xf32> to vector<8x1023xf32>
    %159 = tpu.concatenate %157, %158 in 1 : vector<8x1xf32>, vector<8x1023xf32> -> vector<8x1024xf32>
    %160 = vector.extract_strided_slice %132 {offsets = [3, 0], sizes = [1, 1024], strides = [1, 1]} : vector<9x1024xf32> to vector<1x1024xf32>
    %161 = vector.broadcast %160 : vector<1x1024xf32> to vector<8x1024xf32>
    %162 = arith.mulf %159, %161 : vector<8x1024xf32>
    %163 = vector.extract_strided_slice %132 {offsets = [4, 0], sizes = [1, 1024], strides = [1, 1]} : vector<9x1024xf32> to vector<1x1024xf32>
    %164 = vector.broadcast %163 : vector<1x1024xf32> to vector<8x1024xf32>
    %165 = arith.mulf %137, %164 : vector<8x1024xf32>
    %166 = vector.extract_strided_slice %137 {offsets = [0, 1], sizes = [8, 1023], strides = [1, 1]} : vector<8x1024xf32> to vector<8x1023xf32>
    %167 = vector.extract_strided_slice %137 {offsets = [0, 0], sizes = [8, 1], strides = [1, 1]} : vector<8x1024xf32> to vector<8x1xf32>
    %168 = tpu.concatenate %166, %167 in 1 : vector<8x1023xf32>, vector<8x1xf32> -> vector<8x1024xf32>
    %169 = vector.extract_strided_slice %132 {offsets = [5, 0], sizes = [1, 1024], strides = [1, 1]} : vector<9x1024xf32> to vector<1x1024xf32>
    %170 = vector.broadcast %169 : vector<1x1024xf32> to vector<8x1024xf32>
    %171 = arith.mulf %168, %170 : vector<8x1024xf32>
    %172 = vector.extract_strided_slice %137 {offsets = [0, 15], sizes = [8, 1009], strides = [1, 1]} : vector<8x1024xf32> to vector<8x1009xf32>
    %173 = vector.extract_strided_slice %137 {offsets = [0, 0], sizes = [8, 15], strides = [1, 1]} : vector<8x1024xf32> to vector<8x15xf32>
    %174 = tpu.concatenate %172, %173 in 1 : vector<8x1009xf32>, vector<8x15xf32> -> vector<8x1024xf32>
    %175 = vector.extract_strided_slice %132 {offsets = [6, 0], sizes = [1, 1024], strides = [1, 1]} : vector<9x1024xf32> to vector<1x1024xf32>
    %176 = vector.broadcast %175 : vector<1x1024xf32> to vector<8x1024xf32>
    %177 = arith.mulf %174, %176 : vector<8x1024xf32>
    %178 = vector.extract_strided_slice %137 {offsets = [0, 16], sizes = [8, 1008], strides = [1, 1]} : vector<8x1024xf32> to vector<8x1008xf32>
    %179 = vector.extract_strided_slice %137 {offsets = [0, 0], sizes = [8, 16], strides = [1, 1]} : vector<8x1024xf32> to vector<8x16xf32>
    %180 = tpu.concatenate %178, %179 in 1 : vector<8x1008xf32>, vector<8x16xf32> -> vector<8x1024xf32>
    %181 = vector.extract_strided_slice %132 {offsets = [7, 0], sizes = [1, 1024], strides = [1, 1]} : vector<9x1024xf32> to vector<1x1024xf32>
    %182 = vector.broadcast %181 : vector<1x1024xf32> to vector<8x1024xf32>
    %183 = arith.mulf %180, %182 : vector<8x1024xf32>
    %184 = vector.extract_strided_slice %137 {offsets = [0, 17], sizes = [8, 1007], strides = [1, 1]} : vector<8x1024xf32> to vector<8x1007xf32>
    %185 = vector.extract_strided_slice %137 {offsets = [0, 0], sizes = [8, 17], strides = [1, 1]} : vector<8x1024xf32> to vector<8x17xf32>
    %186 = tpu.concatenate %184, %185 in 1 : vector<8x1007xf32>, vector<8x17xf32> -> vector<8x1024xf32>
    %187 = vector.extract_strided_slice %132 {offsets = [8, 0], sizes = [1, 1024], strides = [1, 1]} : vector<9x1024xf32> to vector<1x1024xf32>
    %188 = vector.broadcast %187 : vector<1x1024xf32> to vector<8x1024xf32>
    %189 = arith.mulf %186, %188 : vector<8x1024xf32>
    %190 = tpu.concatenate %144, %150, %156, %162, %165, %171, %177, %183, %189 in 0 : vector<8x1024xf32>, vector<8x1024xf32>, vector<8x1024xf32>, vector<8x1024xf32>, vector<8x1024xf32>, vector<8x1024xf32>, vector<8x1024xf32>, vector<8x1024xf32>, vector<8x1024xf32> -> vector<72x1024xf32>
    %cst_25 = arith.constant dense<0.000000e+00> : vector<8x1024xf32>
    %191 = tpu.matmul %138, %190, %cst_25 {dimension_numbers = #tpu.dot_dimension_numbers<[1], [0], [0], [1], [0, 0, 1, 1], [], []>} : vector<8x72xf32>, vector<72x1024xf32>, vector<8x1024xf32> -> vector<8x1024xf32>
    %192 = vector.broadcast %4 : vector<8x1xf32> to vector<8x1024xf32>
    %193 = arith.addf %191, %192 : vector<8x1024xf32>
    %194 = vector.broadcast %5 : vector<8x1xf32> to vector<8x1024xf32>
    %195 = arith.mulf %193, %194 : vector<8x1024xf32>
    %196 = vector.broadcast %6 : vector<8x1xf32> to vector<8x1024xf32>
    %197 = arith.addf %195, %196 : vector<8x1024xf32>
    %198 = math.tanh %197 : vector<8x1024xf32>
    %c0_26 = arith.constant 0 : index
    %c0_27 = arith.constant 0 : index
    %199 = vector.load %arg8[%c0_26, %c0_27] : memref<8x72xf32, #tpu.memory_space<vmem>>, vector<8x72xf32>
    %200 = vector.extract_strided_slice %198 {offsets = [0, 1007], sizes = [8, 17], strides = [1, 1]} : vector<8x1024xf32> to vector<8x17xf32>
    %201 = vector.extract_strided_slice %198 {offsets = [0, 0], sizes = [8, 1007], strides = [1, 1]} : vector<8x1024xf32> to vector<8x1007xf32>
    %202 = tpu.concatenate %200, %201 in 1 : vector<8x17xf32>, vector<8x1007xf32> -> vector<8x1024xf32>
    %203 = vector.extract_strided_slice %132 {offsets = [0, 0], sizes = [1, 1024], strides = [1, 1]} : vector<9x1024xf32> to vector<1x1024xf32>
    %204 = vector.broadcast %203 : vector<1x1024xf32> to vector<8x1024xf32>
    %205 = arith.mulf %202, %204 : vector<8x1024xf32>
    %206 = vector.extract_strided_slice %198 {offsets = [0, 1008], sizes = [8, 16], strides = [1, 1]} : vector<8x1024xf32> to vector<8x16xf32>
    %207 = vector.extract_strided_slice %198 {offsets = [0, 0], sizes = [8, 1008], strides = [1, 1]} : vector<8x1024xf32> to vector<8x1008xf32>
    %208 = tpu.concatenate %206, %207 in 1 : vector<8x16xf32>, vector<8x1008xf32> -> vector<8x1024xf32>
    %209 = vector.extract_strided_slice %132 {offsets = [1, 0], sizes = [1, 1024], strides = [1, 1]} : vector<9x1024xf32> to vector<1x1024xf32>
    %210 = vector.broadcast %209 : vector<1x1024xf32> to vector<8x1024xf32>
    %211 = arith.mulf %208, %210 : vector<8x1024xf32>
    %212 = vector.extract_strided_slice %198 {offsets = [0, 1009], sizes = [8, 15], strides = [1, 1]} : vector<8x1024xf32> to vector<8x15xf32>
    %213 = vector.extract_strided_slice %198 {offsets = [0, 0], sizes = [8, 1009], strides = [1, 1]} : vector<8x1024xf32> to vector<8x1009xf32>
    %214 = tpu.concatenate %212, %213 in 1 : vector<8x15xf32>, vector<8x1009xf32> -> vector<8x1024xf32>
    %215 = vector.extract_strided_slice %132 {offsets = [2, 0], sizes = [1, 1024], strides = [1, 1]} : vector<9x1024xf32> to vector<1x1024xf32>
    %216 = vector.broadcast %215 : vector<1x1024xf32> to vector<8x1024xf32>
    %217 = arith.mulf %214, %216 : vector<8x1024xf32>
    %218 = vector.extract_strided_slice %198 {offsets = [0, 1023], sizes = [8, 1], strides = [1, 1]} : vector<8x1024xf32> to vector<8x1xf32>
    %219 = vector.extract_strided_slice %198 {offsets = [0, 0], sizes = [8, 1023], strides = [1, 1]} : vector<8x1024xf32> to vector<8x1023xf32>
    %220 = tpu.concatenate %218, %219 in 1 : vector<8x1xf32>, vector<8x1023xf32> -> vector<8x1024xf32>
    %221 = vector.extract_strided_slice %132 {offsets = [3, 0], sizes = [1, 1024], strides = [1, 1]} : vector<9x1024xf32> to vector<1x1024xf32>
    %222 = vector.broadcast %221 : vector<1x1024xf32> to vector<8x1024xf32>
    %223 = arith.mulf %220, %222 : vector<8x1024xf32>
    %224 = vector.extract_strided_slice %132 {offsets = [4, 0], sizes = [1, 1024], strides = [1, 1]} : vector<9x1024xf32> to vector<1x1024xf32>
    %225 = vector.broadcast %224 : vector<1x1024xf32> to vector<8x1024xf32>
    %226 = arith.mulf %198, %225 : vector<8x1024xf32>
    %227 = vector.extract_strided_slice %198 {offsets = [0, 1], sizes = [8, 1023], strides = [1, 1]} : vector<8x1024xf32> to vector<8x1023xf32>
    %228 = vector.extract_strided_slice %198 {offsets = [0, 0], sizes = [8, 1], strides = [1, 1]} : vector<8x1024xf32> to vector<8x1xf32>
    %229 = tpu.concatenate %227, %228 in 1 : vector<8x1023xf32>, vector<8x1xf32> -> vector<8x1024xf32>
    %230 = vector.extract_strided_slice %132 {offsets = [5, 0], sizes = [1, 1024], strides = [1, 1]} : vector<9x1024xf32> to vector<1x1024xf32>
    %231 = vector.broadcast %230 : vector<1x1024xf32> to vector<8x1024xf32>
    %232 = arith.mulf %229, %231 : vector<8x1024xf32>
    %233 = vector.extract_strided_slice %198 {offsets = [0, 15], sizes = [8, 1009], strides = [1, 1]} : vector<8x1024xf32> to vector<8x1009xf32>
    %234 = vector.extract_strided_slice %198 {offsets = [0, 0], sizes = [8, 15], strides = [1, 1]} : vector<8x1024xf32> to vector<8x15xf32>
    %235 = tpu.concatenate %233, %234 in 1 : vector<8x1009xf32>, vector<8x15xf32> -> vector<8x1024xf32>
    %236 = vector.extract_strided_slice %132 {offsets = [6, 0], sizes = [1, 1024], strides = [1, 1]} : vector<9x1024xf32> to vector<1x1024xf32>
    %237 = vector.broadcast %236 : vector<1x1024xf32> to vector<8x1024xf32>
    %238 = arith.mulf %235, %237 : vector<8x1024xf32>
    %239 = vector.extract_strided_slice %198 {offsets = [0, 16], sizes = [8, 1008], strides = [1, 1]} : vector<8x1024xf32> to vector<8x1008xf32>
    %240 = vector.extract_strided_slice %198 {offsets = [0, 0], sizes = [8, 16], strides = [1, 1]} : vector<8x1024xf32> to vector<8x16xf32>
    %241 = tpu.concatenate %239, %240 in 1 : vector<8x1008xf32>, vector<8x16xf32> -> vector<8x1024xf32>
    %242 = vector.extract_strided_slice %132 {offsets = [7, 0], sizes = [1, 1024], strides = [1, 1]} : vector<9x1024xf32> to vector<1x1024xf32>
    %243 = vector.broadcast %242 : vector<1x1024xf32> to vector<8x1024xf32>
    %244 = arith.mulf %241, %243 : vector<8x1024xf32>
    %245 = vector.extract_strided_slice %198 {offsets = [0, 17], sizes = [8, 1007], strides = [1, 1]} : vector<8x1024xf32> to vector<8x1007xf32>
    %246 = vector.extract_strided_slice %198 {offsets = [0, 0], sizes = [8, 17], strides = [1, 1]} : vector<8x1024xf32> to vector<8x17xf32>
    %247 = tpu.concatenate %245, %246 in 1 : vector<8x1007xf32>, vector<8x17xf32> -> vector<8x1024xf32>
    %248 = vector.extract_strided_slice %132 {offsets = [8, 0], sizes = [1, 1024], strides = [1, 1]} : vector<9x1024xf32> to vector<1x1024xf32>
    %249 = vector.broadcast %248 : vector<1x1024xf32> to vector<8x1024xf32>
    %250 = arith.mulf %247, %249 : vector<8x1024xf32>
    %251 = tpu.concatenate %205, %211, %217, %223, %226, %232, %238, %244, %250 in 0 : vector<8x1024xf32>, vector<8x1024xf32>, vector<8x1024xf32>, vector<8x1024xf32>, vector<8x1024xf32>, vector<8x1024xf32>, vector<8x1024xf32>, vector<8x1024xf32>, vector<8x1024xf32> -> vector<72x1024xf32>
    %cst_28 = arith.constant dense<0.000000e+00> : vector<8x1024xf32>
    %252 = tpu.matmul %199, %251, %cst_28 {dimension_numbers = #tpu.dot_dimension_numbers<[1], [0], [0], [1], [0, 0, 1, 1], [], []>} : vector<8x72xf32>, vector<72x1024xf32>, vector<8x1024xf32> -> vector<8x1024xf32>
    %253 = vector.broadcast %7 : vector<8x1xf32> to vector<8x1024xf32>
    %254 = arith.addf %252, %253 : vector<8x1024xf32>
    %255 = vector.extract_strided_slice %254 {offsets = [0, 0], sizes = [8, 256], strides = [1, 1]} : vector<8x1024xf32> to vector<8x256xf32>
    %c0_29 = arith.constant 0 : index
    %c0_30 = arith.constant 0 : index
    %c0_31 = arith.constant 0 : index
    %256 = vector.load %arg10[%c0_29, %c0_30, %c0_31] : memref<4x8x256xf32, #tpu.memory_space<vmem>>, vector<1x8x256xf32>
    %257 = vector.shape_cast %256 : vector<1x8x256xf32> to vector<8x256xf32>
    %258 = vector.shape_cast %255 : vector<8x256xf32> to vector<1x8x256xf32>
    tpu.vector_store %arg10[%c0_29, %c0_30, %c0_31], %258 {strides = array<i32>} : memref<4x8x256xf32, #tpu.memory_space<vmem>>, vector<1x8x256xf32>,
    %259 = vector.extract_strided_slice %254 {offsets = [0, 256], sizes = [8, 256], strides = [1, 1]} : vector<8x1024xf32> to vector<8x256xf32>
    %c1_32 = arith.constant 1 : index
    %c0_33 = arith.constant 0 : index
    %c0_34 = arith.constant 0 : index
    %260 = vector.load %arg10[%c1_32, %c0_33, %c0_34] : memref<4x8x256xf32, #tpu.memory_space<vmem>>, vector<1x8x256xf32>
    %261 = vector.shape_cast %260 : vector<1x8x256xf32> to vector<8x256xf32>
    %262 = vector.shape_cast %259 : vector<8x256xf32> to vector<1x8x256xf32>
    tpu.vector_store %arg10[%c1_32, %c0_33, %c0_34], %262 {strides = array<i32>} : memref<4x8x256xf32, #tpu.memory_space<vmem>>, vector<1x8x256xf32>,
    %263 = vector.extract_strided_slice %254 {offsets = [0, 512], sizes = [8, 256], strides = [1, 1]} : vector<8x1024xf32> to vector<8x256xf32>
    %c2 = arith.constant 2 : index
    %c0_35 = arith.constant 0 : index
    %c0_36 = arith.constant 0 : index
    %264 = vector.load %arg10[%c2, %c0_35, %c0_36] : memref<4x8x256xf32, #tpu.memory_space<vmem>>, vector<1x8x256xf32>
    %265 = vector.shape_cast %264 : vector<1x8x256xf32> to vector<8x256xf32>
    %266 = vector.shape_cast %263 : vector<8x256xf32> to vector<1x8x256xf32>
    tpu.vector_store %arg10[%c2, %c0_35, %c0_36], %266 {strides = array<i32>} : memref<4x8x256xf32, #tpu.memory_space<vmem>>, vector<1x8x256xf32>,
    %267 = vector.extract_strided_slice %254 {offsets = [0, 768], sizes = [8, 256], strides = [1, 1]} : vector<8x1024xf32> to vector<8x256xf32>
    %c3 = arith.constant 3 : index
    %c0_37 = arith.constant 0 : index
    %c0_38 = arith.constant 0 : index
    %268 = vector.load %arg10[%c3, %c0_37, %c0_38] : memref<4x8x256xf32, #tpu.memory_space<vmem>>, vector<1x8x256xf32>
    %269 = vector.shape_cast %268 : vector<1x8x256xf32> to vector<8x256xf32>
    %270 = vector.shape_cast %267 : vector<8x256xf32> to vector<1x8x256xf32>
    tpu.vector_store %arg10[%c3, %c0_37, %c0_38], %270 {strides = array<i32>} : memref<4x8x256xf32, #tpu.memory_space<vmem>>, vector<1x8x256xf32>,
    return
  }
  func.func @transform_0(%arg0: i32) -> (i32, i32, i32) {
    %c0_i32 = arith.constant 0 : i32
    %c0_i32_0 = arith.constant 0 : i32
    %c0_i32_1 = arith.constant 0 : i32
    %c0_i32_2 = arith.constant 0 : i32
    return %c0_i32, %c0_i32_0, %c0_i32_1 : i32, i32, i32
  }
  func.func @transform_1(%arg0: i32) -> (i32, i32, i32) {
    %c0_i32 = arith.constant 0 : i32
    %c0_i32_0 = arith.constant 0 : i32
    %c0_i32_1 = arith.constant 0 : i32
    %c0_i32_2 = arith.constant 0 : i32
    return %c0_i32, %c0_i32_0, %c0_i32_1 : i32, i32, i32
  }
  func.func @transform_2(%arg0: i32) -> (i32, i32) {
    %c0_i32 = arith.constant 0 : i32
    %c0_i32_0 = arith.constant 0 : i32
    %c0_i32_1 = arith.constant 0 : i32
    return %c0_i32, %c0_i32_0 : i32, i32
  }
  func.func @transform_3(%arg0: i32) -> (i32, i32) {
    %c0_i32 = arith.constant 0 : i32
    %c0_i32_0 = arith.constant 0 : i32
    %c0_i32_1 = arith.constant 0 : i32
    return %c0_i32, %c0_i32_0 : i32, i32
  }
  func.func @transform_4(%arg0: i32) -> (i32, i32) {
    %c0_i32 = arith.constant 0 : i32
    %c0_i32_0 = arith.constant 0 : i32
    %c0_i32_1 = arith.constant 0 : i32
    return %c0_i32, %c0_i32_0 : i32, i32
  }
  func.func @transform_5(%arg0: i32) -> (i32, i32) {
    %c0_i32 = arith.constant 0 : i32
    %c0_i32_0 = arith.constant 0 : i32
    %c0_i32_1 = arith.constant 0 : i32
    return %c0_i32, %c0_i32_0 : i32, i32
  }
  func.func @transform_6(%arg0: i32) -> (i32, i32) {
    %c0_i32 = arith.constant 0 : i32
    %c0_i32_0 = arith.constant 0 : i32
    %c0_i32_1 = arith.constant 0 : i32
    return %c0_i32, %c0_i32_0 : i32, i32
  }
  func.func @transform_7(%arg0: i32) -> (i32, i32) {
    %c0_i32 = arith.constant 0 : i32
    %c0_i32_0 = arith.constant 0 : i32
    %c0_i32_1 = arith.constant 0 : i32
    return %c0_i32, %c0_i32_0 : i32, i32
  }
  func.func @transform_8(%arg0: i32) -> (i32, i32) {
    %c0_i32 = arith.constant 0 : i32
    %c0_i32_0 = arith.constant 0 : i32
    %c0_i32_1 = arith.constant 0 : i32
    return %c0_i32, %c0_i32_0 : i32, i32
  }
  func.func @transform_9(%arg0: i32) -> (i32, i32, i32) {
    %c0_i32 = arith.constant 0 : i32
    %c0_i32_0 = arith.constant 0 : i32
    %c0_i32_1 = arith.constant 0 : i32
    %c0_i32_2 = arith.constant 0 : i32
    return %c0_i32, %c0_i32_0, %c0_i32_1 : i32, i32, i32
  }
}

</mosaic_0001>

<llo_original>
// kernel: _lambda_.1
$region0: #{_lambda_.1}
  #allocation0 [shape = 'u32[]', space=smem, size = 0x4, offset = 0x4, fixed_abs, tag = 'smem constant byte address 0x4 - core index']
  #allocation1 [shape = 'u32[72,128]{1,0:T(1,128)}', space=vmem, size = 0x9000, scoped, tag = 'internal scratch']
  %s0 = inlined_call_operand.vmem [shape: f32[2,8,64], index: 0, kind: input, shape index: {}]
  %s1 = inlined_call_operand.vmem [shape: f32[2,8,256], index: 1, kind: input, shape index: {}]
  %s2 = inlined_call_operand.vmem [shape: f32[64,256], index: 2, kind: input, shape index: {}]
  %s3 = inlined_call_operand.vmem [shape: f32[9,64], index: 3, kind: input, shape index: {}]
  %s4 = inlined_call_operand.vmem [shape: f32[9,1024], index: 4, kind: input, shape index: {}]
  %s5 = inlined_call_operand.vmem [shape: f32[8,72], index: 5, kind: input, shape index: {}]
  %s6 = inlined_call_operand.vmem [shape: f32[8,72], index: 6, kind: input, shape index: {}]
  %s7 = inlined_call_operand.vmem [shape: f32[8,72], index: 7, kind: input, shape index: {}]
  %s8 = inlined_call_operand.vmem [shape: f32[8,8], index: 8, kind: input, shape index: {}]
  %s9 = inlined_call_operand.vmem [shape: f32[4,8,256], index: 9, kind: output, shape index: {}]
  %s10 = sld [smem:[#allocation0]]
  $region46: #{_lambda_.1} parent=0
    _
  %s12 = ssub.s32 1, %s10
  %s13 = scalar_select 0, %s12, %s10
  // Predicated region
  $region2: #{_lambda_.1} parent=0 // pred_check
    _
  $region3: #{_lambda_.1} parent=0 // pred_check_branch
    %15 = sbr.rel (0) target = $region5
  $region4: #{_lambda_.1} parent=0 // pred_region
    _
  $region5: #{_lambda_.1} parent=0 // pred_fallthru
    _
  // Predicated region
  $region6: #{_lambda_.1} parent=0 // pred_check
    _
  $region7: #{_lambda_.1} parent=0 // pred_check_branch
    %17 = sbr.rel (0) target = $region9
  $region8: #{_lambda_.1} parent=0 // pred_region
    _
  $region9: #{_lambda_.1} parent=0 // pred_fallthru
    _
  // Predicated region
  $region10: #{_lambda_.1} parent=0 // pred_check
    _
  $region11: #{_lambda_.1} parent=0 // pred_check_branch
    %19 = sbr.rel (0) target = $region13
  $region12: #{_lambda_.1} parent=0 // pred_region
    _
  $region13: #{_lambda_.1} parent=0 // pred_fallthru
    _
  // Predicated region
  $region14: #{_lambda_.1} parent=0 // pred_check
    _
  $region15: #{_lambda_.1} parent=0 // pred_check_branch
    %21 = sbr.rel (0) target = $region17
  $region16: #{_lambda_.1} parent=0 // pred_region
    _
  $region17: #{_lambda_.1} parent=0 // pred_fallthru
    _
  // Predicated region
  $region18: #{_lambda_.1} parent=0 // pred_check
    _
  $region19: #{_lambda_.1} parent=0 // pred_check_branch
    %23 = sbr.rel (0) target = $region21
  $region20: #{_lambda_.1} parent=0 // pred_region
    _
  $region21: #{_lambda_.1} parent=0 // pred_fallthru
    _
  // Predicated region
  $region22: #{_lambda_.1} parent=0 // pred_check
    _
  $region23: #{_lambda_.1} parent=0 // pred_check_branch
    %25 = sbr.rel (0) target = $region25
  $region24: #{_lambda_.1} parent=0 // pred_region
    _
  $region25: #{_lambda_.1} parent=0 // pred_fallthru
    _
  // Predicated region
  $region26: #{_lambda_.1} parent=0 // pred_check
    _
  $region27: #{_lambda_.1} parent=0 // pred_check_branch
    %27 = sbr.rel (0) target = $region29
  $region28: #{_lambda_.1} parent=0 // pred_region
    _
  $region29: #{_lambda_.1} parent=0 // pred_fallthru
    _
  // Predicated region
  $region30: #{_lambda_.1} parent=0 // pred_check
    _
  $region31: #{_lambda_.1} parent=0 // pred_check_branch
    %29 = sbr.rel (0) target = $region33
  $region32: #{_lambda_.1} parent=0 // pred_region
    _
  $region33: #{_lambda_.1} parent=0 // pred_fallthru
    _
  // Predicated region
  $region34: #{_lambda_.1} parent=0 // pred_check
    _
  $region35: #{_lambda_.1} parent=0 // pred_check_branch
    %31 = sbr.rel (0) target = $region37
  $region36: #{_lambda_.1} parent=0 // pred_region
    _
  $region37: #{_lambda_.1} parent=0 // pred_fallthru
    _
  %v32 = vld [vmem:[%s8] sm:$0xff]
  %v33 = vld [vmem:[%s2] sm:$0xff]
  %v34 = vld [vmem:[%s2 + $0x8] sm:$0xff]
  %v35 = vld [vmem:[%s2 + $0x10] sm:$0xff]
  %v36 = vld [vmem:[%s2 + $0x18] sm:$0xff]
  %v37 = vld [vmem:[%s2 + $0x20] sm:$0xff]
  %v38 = vld [vmem:[%s2 + $0x28] sm:$0xff]
  %v39 = vld [vmem:[%s2 + $0x30] sm:$0xff]
  %v40 = vld [vmem:[%s2 + $0x38] sm:$0xff]
  %v41 = vld [vmem:[%s2 + $0x40] sm:$0xff]
  %v42 = vld [vmem:[%s2 + $0x48] sm:$0xff]
  %v43 = vld [vmem:[%s2 + $0x50] sm:$0xff]
  %v44 = vld [vmem:[%s2 + $0x58] sm:$0xff]
  %v45 = vld [vmem:[%s2 + $0x60] sm:$0xff]
  %v46 = vld [vmem:[%s2 + $0x68] sm:$0xff]
  %v47 = vld [vmem:[%s2 + $0x70] sm:$0xff]
  %v48 = vld [vmem:[%s2 + $0x78] sm:$0xff]
  %v49 = vld [vmem:[%s3] sm:$0xff]
  %v50 = vld [vmem:[%s3 + $0x8] sm:$0x1]
  %v51 = vld [vmem:[%s5] sm:$0xff]
  %v52 = vld [vmem:[%s0] sm:$0xff]
  %54 = vrot.lane.b32.xlu0 %v52, 73
  %v55 = vpop.permute.xlu0 %54
  %57 = vrot.lane.b32.xlu0 %v52, 9
  %v58 = vpop.permute.xlu0 %57
  %vm60 = vcmask 72704
  %v61 = vsel %vm60, %v55, %v58
  %v62 = vperm.slane %v49, 0
  %v63 = vmul.f32 %v61, %v62
  %64 = vrot.lane.b32.xlu0 %v52, 72
  %v65 = vpop.permute.xlu0 %64
  %67 = vrot.lane.b32.xlu0 %v52, 8
  %v68 = vpop.permute.xlu0 %67
  %vm70 = vcmask 64512
  %v71 = vsel %vm70, %v65, %v68
  %v72 = vperm.slane %v49, 1
  %v73 = vmul.f32 %v71, %v72
  %74 = vrot.lane.b32.xlu0 %v52, 71
  %v75 = vpop.permute.xlu0 %74
  %77 = vrot.lane.b32.xlu0 %v52, 7
  %v78 = vpop.permute.xlu0 %77
  %vm80 = vcmask 56320
  %v81 = vsel %vm80, %v75, %v78
  %v82 = vperm.slane %v49, 2
  %v83 = vmul.f32 %v81, %v82
  %84 = vrot.lane.b32.xlu0 %v52, 65
  %v85 = vpop.permute.xlu0 %84
  %87 = vrot.lane.b32.xlu0 %v52, 1
  %v88 = vpop.permute.xlu0 %87
  %vm90 = vcmask 7168
  %v91 = vsel %vm90, %v85, %v88
  %v92 = vperm.slane %v49, 3
  %v93 = vmul.f32 %v91, %v92
  %v94 = vperm.slane %v49, 4
  %v95 = vmul.f32 %v52, %v94
  %96 = vrot.lane.b32.xlu0 %v52, 127
  %v97 = vpop.permute.xlu0 %96
  %99 = vrot.lane.b32.xlu0 %v52, 63
  %v100 = vpop.permute.xlu0 %99
  %vm102 = vcmask 515072
  %v103 = vsel %vm102, %v97, %v100
  %v104 = vperm.slane %v49, 5
  %v105 = vmul.f32 %v103, %v104
  %106 = vrot.lane.b32.xlu0 %v52, 121
  %v107 = vpop.permute.xlu0 %106
  %109 = vrot.lane.b32.xlu0 %v52, 57
  %v110 = vpop.permute.xlu0 %109
  %vm112 = vcmask 465920
  %v113 = vsel %vm112, %v107, %v110
  %v114 = vperm.slane %v49, 6
  %v115 = vmul.f32 %v113, %v114
  %116 = vrot.lane.b32.xlu0 %v52, 120
  %v117 = vpop.permute.xlu0 %116
  %119 = vrot.lane.b32.xlu0 %v52, 56
  %v120 = vpop.permute.xlu0 %119
  %vm122 = vcmask 457728
  %v123 = vsel %vm122, %v117, %v120
  %v124 = vperm.slane %v49, 7
  %v125 = vmul.f32 %v123, %v124
  %126 = vrot.lane.b32.xlu0 %v52, 119
  %v127 = vpop.permute.xlu0 %126
  %129 = vrot.lane.b32.xlu0 %v52, 55
  %v130 = vpop.permute.xlu0 %129
  %vm132 = vcmask 449536
  %v133 = vsel %vm132, %v127, %v130
  %v134 = vperm.slane %v50, 0
  %v135 = vmul.f32 %v133, %v134
  %137 = vset.pattern.permute.xlu0 0
  %138 = vperm.xlu0 %137, %v32
  %v139 = vpop.permute.xlu0 %138
  %vm141 = vcmask 588800
  %v143 = vsel %vm141, %v51, 0
  %145 = vmatpush.msra.mxu0 0.0
  %146 = vmatpush.msra.mxu0 0.0
  %147 = vmatpush.msra.mxu0 0.0
  %148 = vmatpush.msra.mxu0 0.0
  %149 = vmatpush.msra.mxu0 0.0
  %150 = vmatpush.msra.mxu0 0.0
  %151 = vmatpush.msra.mxu0 0.0
  %152 = vmatpush.msra.mxu0 %v135
  %153 = vmatpush.msra.mxu0 %v125
  %154 = vmatpush.msra.mxu0 %v115
  %155 = vmatpush.msra.mxu0 %v105
  %156 = vmatpush.msra.mxu0 %v95
  %157 = vmatpush.msra.mxu0 %v93
  %158 = vmatpush.msra.mxu0 %v83
  %159 = vmatpush.msra.mxu0 %v73
  %160 = vmatpush.msra.mxu0 %v63
  %161 = vmatmul.f32.gmra.mxu0 %v143
  %v162 = vpop.f32.mrf.mxu0
  %v163 = vadd.f32 %v139, %v162
  %164 = vdwg.mxu0
  %vm165 = vcmask 523264
  %v167 = vsel %vm165, %v163, 0
  %169 = vmatpush.msra.mxu0 0.0
  %170 = vmatpush.msra.mxu0 0.0
  %171 = vmatpush.msra.mxu0 0.0
  %172 = vmatpush.msra.mxu0 0.0
  %173 = vmatpush.msra.mxu0 0.0
  %174 = vmatpush.msra.mxu0 0.0
  %175 = vmatpush.msra.mxu0 0.0
  %176 = vmatpush.msra.mxu0 0.0
  %177 = vmatpush.msra.mxu0 %v47
  %178 = vmatpush.msra.mxu0 %v45
  %179 = vmatpush.msra.mxu0 %v43
  %180 = vmatpush.msra.mxu0 %v41
  %181 = vmatpush.msra.mxu0 %v39
  %182 = vmatpush.msra.mxu0 %v37
  %183 = vmatpush.msra.mxu0 %v35
  %184 = vmatpush.msra.mxu0 %v33
  %185 = vmatmul.f32.gmra.mxu0 %v167
  %v186 = vpop.f32.mrf.mxu0
  %v187 = vadd.f32 0.0, %v186
  %188 = vdwg.mxu0
  %189 = vmatpush.msra.mxu0 0.0
  %190 = vmatpush.msra.mxu0 0.0
  %191 = vmatpush.msra.mxu0 0.0
  %192 = vmatpush.msra.mxu0 0.0
  %193 = vmatpush.msra.mxu0 0.0
  %194 = vmatpush.msra.mxu0 0.0
  %195 = vmatpush.msra.mxu0 0.0
  %196 = vmatpush.msra.mxu0 0.0
  %197 = vmatpush.msra.mxu0 %v48
  %198 = vmatpush.msra.mxu0 %v46
  %199 = vmatpush.msra.mxu0 %v44
  %200 = vmatpush.msra.mxu0 %v42
  %201 = vmatpush.msra.mxu0 %v40
  %202 = vmatpush.msra.mxu0 %v38
  %203 = vmatpush.msra.mxu0 %v36
  %204 = vmatpush.msra.mxu0 %v34
  %205 = vmatmul.f32.gmra.mxu0 %v167
  %v206 = vpop.f32.mrf.mxu0
  %v207 = vadd.f32 0.0, %v206
  %208 = vdwg.mxu0
  %s209 = scalar_lea.vmem %s0, 8
  %v210 = vld [vmem:[%s209] sm:$0xff]
  %212 = vrot.lane.b32.xlu0 %v210, 73
  %v213 = vpop.permute.xlu0 %212
  %215 = vrot.lane.b32.xlu0 %v210, 9
  %v216 = vpop.permute.xlu0 %215
  %v218 = vsel %vm60, %v213, %v216
  %v219 = vmul.f32 %v218, %v62
  %220 = vrot.lane.b32.xlu0 %v210, 72
  %v221 = vpop.permute.xlu0 %220
  %223 = vrot.lane.b32.xlu0 %v210, 8
  %v224 = vpop.permute.xlu0 %223
  %v226 = vsel %vm70, %v221, %v224
  %v227 = vmul.f32 %v226, %v72
  %228 = vrot.lane.b32.xlu0 %v210, 71
  %v229 = vpop.permute.xlu0 %228
  %231 = vrot.lane.b32.xlu0 %v210, 7
  %v232 = vpop.permute.xlu0 %231
  %v234 = vsel %vm80, %v229, %v232
  %v235 = vmul.f32 %v234, %v82
  %236 = vrot.lane.b32.xlu0 %v210, 65
  %v237 = vpop.permute.xlu0 %236
  %239 = vrot.lane.b32.xlu0 %v210, 1
  %v240 = vpop.permute.xlu0 %239
  %v242 = vsel %vm90, %v237, %v240
  %v243 = vmul.f32 %v242, %v92
  %v244 = vmul.f32 %v210, %v94
  %245 = vrot.lane.b32.xlu0 %v210, 127
  %v246 = vpop.permute.xlu0 %245
  %248 = vrot.lane.b32.xlu0 %v210, 63
  %v249 = vpop.permute.xlu0 %248
  %v251 = vsel %vm102, %v246, %v249
  %v252 = vmul.f32 %v251, %v104
  %253 = vrot.lane.b32.xlu0 %v210, 121
  %v254 = vpop.permute.xlu0 %253
  %256 = vrot.lane.b32.xlu0 %v210, 57
  %v257 = vpop.permute.xlu0 %256
  %v259 = vsel %vm112, %v254, %v257
  %v260 = vmul.f32 %v259, %v114
  %261 = vrot.lane.b32.xlu0 %v210, 120
  %v262 = vpop.permute.xlu0 %261
  %264 = vrot.lane.b32.xlu0 %v210, 56
  %v265 = vpop.permute.xlu0 %264
  %v267 = vsel %vm122, %v262, %v265
  %v268 = vmul.f32 %v267, %v124
  %269 = vrot.lane.b32.xlu0 %v210, 119
  %v270 = vpop.permute.xlu0 %269
  %272 = vrot.lane.b32.xlu0 %v210, 55
  %v273 = vpop.permute.xlu0 %272
  %v275 = vsel %vm132, %v270, %v273
  %v276 = vmul.f32 %v275, %v134
  %277 = vmatpush.msra.mxu0 0.0
  %278 = vmatpush.msra.mxu0 0.0
  %279 = vmatpush.msra.mxu0 0.0
  %280 = vmatpush.msra.mxu0 0.0
  %281 = vmatpush.msra.mxu0 0.0
  %282 = vmatpush.msra.mxu0 0.0
  %283 = vmatpush.msra.mxu0 0.0
  %284 = vmatpush.msra.mxu0 %v276
  %285 = vmatpush.msra.mxu0 %v268
  %286 = vmatpush.msra.mxu0 %v260
  %287 = vmatpush.msra.mxu0 %v252
  %288 = vmatpush.msra.mxu0 %v244
  %289 = vmatpush.msra.mxu0 %v243
  %290 = vmatpush.msra.mxu0 %v235
  %291 = vmatpush.msra.mxu0 %v227
  %292 = vmatpush.msra.mxu0 %v219
  %293 = vmatmul.f32.gmra.mxu0 %v143
  %v294 = vpop.f32.mrf.mxu0
  %v295 = vadd.f32 %v139, %v294
  %296 = vdwg.mxu0
  %v298 = vsel %vm165, %v295, 0
  %300 = vmatpush.msra.mxu0 0.0
  %301 = vmatpush.msra.mxu0 0.0
  %302 = vmatpush.msra.mxu0 0.0
  %303 = vmatpush.msra.mxu0 0.0
  %304 = vmatpush.msra.mxu0 0.0
  %305 = vmatpush.msra.mxu0 0.0
  %306 = vmatpush.msra.mxu0 0.0
  %307 = vmatpush.msra.mxu0 0.0
  %308 = vmatpush.msra.mxu0 %v47
  %309 = vmatpush.msra.mxu0 %v45
  %310 = vmatpush.msra.mxu0 %v43
  %311 = vmatpush.msra.mxu0 %v41
  %312 = vmatpush.msra.mxu0 %v39
  %313 = vmatpush.msra.mxu0 %v37
  %314 = vmatpush.msra.mxu0 %v35
  %315 = vmatpush.msra.mxu0 %v33
  %316 = vmatmul.f32.gmra.mxu0 %v298
  %v317 = vpop.f32.mrf.mxu0
  %v318 = vadd.f32 0.0, %v317
  %319 = vdwg.mxu0
  %320 = vmatpush.msra.mxu0 0.0
  %321 = vmatpush.msra.mxu0 0.0
  %322 = vmatpush.msra.mxu0 0.0
  %323 = vmatpush.msra.mxu0 0.0
  %324 = vmatpush.msra.mxu0 0.0
  %325 = vmatpush.msra.mxu0 0.0
  %326 = vmatpush.msra.mxu0 0.0
  %327 = vmatpush.msra.mxu0 0.0
  %328 = vmatpush.msra.mxu0 %v48
  %329 = vmatpush.msra.mxu0 %v46
  %330 = vmatpush.msra.mxu0 %v44
  %331 = vmatpush.msra.mxu0 %v42
  %332 = vmatpush.msra.mxu0 %v40
  %333 = vmatpush.msra.mxu0 %v38
  %334 = vmatpush.msra.mxu0 %v36
  %335 = vmatpush.msra.mxu0 %v34
  %336 = vmatmul.f32.gmra.mxu0 %v298
  %v337 = vpop.f32.mrf.mxu0
  %v338 = vadd.f32 0.0, %v337
  %339 = vdwg.mxu0
  %v340 = vld [vmem:[%s1] sm:$0xff]
  %v341 = vld [vmem:[%s1 + $0x8] sm:$0xff]
  %s342 = scalar_lea.vmem %s1, 16
  %v343 = vld [vmem:[%s342] sm:$0xff]
  %v344 = vld [vmem:[%s342 + $0x8] sm:$0xff]
  %v345 = vld [vmem:[%s4] sm:$0xff]
  %v346 = vld [vmem:[%s4 + $0x8] sm:$0xff]
  %v347 = vld [vmem:[%s4 + $0x10] sm:$0xff]
  %v348 = vld [vmem:[%s4 + $0x18] sm:$0xff]
  %v349 = vld [vmem:[%s4 + $0x20] sm:$0xff]
  %v350 = vld [vmem:[%s4 + $0x28] sm:$0xff]
  %v351 = vld [vmem:[%s4 + $0x30] sm:$0xff]
  %v352 = vld [vmem:[%s4 + $0x38] sm:$0xff]
  %v353 = vld [vmem:[%s4 + $0x40] sm:$0x1]
  %v354 = vld [vmem:[%s4 + $0x48] sm:$0x1]
  %v355 = vld [vmem:[%s4 + $0x50] sm:$0x1]
  %v356 = vld [vmem:[%s4 + $0x58] sm:$0x1]
  %v357 = vld [vmem:[%s4 + $0x60] sm:$0x1]
  %v358 = vld [vmem:[%s4 + $0x68] sm:$0x1]
  %v359 = vld [vmem:[%s4 + $0x70] sm:$0x1]
  %v360 = vld [vmem:[%s4 + $0x78] sm:$0x1]
  %361 = vset.pattern.permute.xlu0 1
  %362 = vperm.xlu0 %361, %v32
  %v363 = vpop.permute.xlu0 %362
  %v365 = vmul.f32 %v187, %v363
  %v366 = vmul.f32 %v207, %v363
  %v367 = vmul.f32 %v318, %v363
  %v368 = vmul.f32 %v338, %v363
  %v369 = vmul.f32 %v340, %v363
  %v370 = vmul.f32 %v341, %v363
  %v371 = vmul.f32 %v343, %v363
  %v372 = vmul.f32 %v344, %v363
  %373 = vset.pattern.permute.xlu0 2
  %374 = vperm.xlu0 %373, %v32
  %v375 = vpop.permute.xlu0 %374
  %v377 = vadd.f32 %v365, %v375
  %v378 = vadd.f32 %v366, %v375
  %v379 = vadd.f32 %v367, %v375
  %v380 = vadd.f32 %v368, %v375
  %v381 = vadd.f32 %v369, %v375
  %v382 = vadd.f32 %v370, %v375
  %v383 = vadd.f32 %v371, %v375
  %v384 = vadd.f32 %v372, %v375
  %v385 = vtanh.pop %v377
  %v386 = vtanh.pop %v378
  %v387 = vtanh.pop %v379
  %v388 = vtanh.pop %v380
  %v389 = vtanh.pop %v381
  %v390 = vtanh.pop %v382
  %v391 = vtanh.pop %v383
  %v392 = vtanh.pop %v384
  %v393 = vld [vmem:[%s6] sm:$0xff]
  %395 = vrot.lane.b32.xlu0 %v392, 17
  %v396 = vpop.permute.xlu0 %395
  %405 = vrot.lane.b32.xlu0 %v385, 17
  %v406 = vpop.permute.xlu0 %405
  %407 = vrot.lane.b32.xlu0 %v386, 17
  %v408 = vpop.permute.xlu0 %407
  %409 = vrot.lane.b32.xlu0 %v387, 17
  %v410 = vpop.permute.xlu0 %409
  %411 = vrot.lane.b32.xlu0 %v388, 17
  %v412 = vpop.permute.xlu0 %411
  %413 = vrot.lane.b32.xlu0 %v389, 17
  %v414 = vpop.permute.xlu0 %413
  %415 = vrot.lane.b32.xlu0 %v390, 17
  %v416 = vpop.permute.xlu0 %415
  %417 = vrot.lane.b32.xlu0 %v391, 17
  %v418 = vpop.permute.xlu0 %417
  %vm419 = vcmask 138240
  %v420 = vsel %vm419, %v406, %v408
  %v421 = vsel %vm419, %v408, %v410
  %v422 = vsel %vm419, %v410, %v412
  %v423 = vsel %vm419, %v412, %v414
  %v424 = vsel %vm419, %v414, %v416
  %v425 = vsel %vm419, %v416, %v418
  %v426 = vsel %vm419, %v418, %v396
  %v435 = vsel %vm419, %v396, %v406
  %v436 = vperm.slane %v345, 0
  %v437 = vperm.slane %v346, 0
  %v438 = vperm.slane %v347, 0
  %v439 = vperm.slane %v348, 0
  %v440 = vperm.slane %v349, 0
  %v441 = vperm.slane %v350, 0
  %v442 = vperm.slane %v351, 0
  %v443 = vperm.slane %v352, 0
  %v444 = vmul.f32 %v435, %v436
  %v445 = vmul.f32 %v420, %v437
  %v446 = vmul.f32 %v421, %v438
  %v447 = vmul.f32 %v422, %v439
  %v448 = vmul.f32 %v423, %v440
  %v449 = vmul.f32 %v424, %v441
  %v450 = vmul.f32 %v425, %v442
  %v451 = vmul.f32 %v426, %v443
  %452 = vrot.lane.b32.xlu0 %v392, 16
  %v453 = vpop.permute.xlu0 %452
  %455 = vrot.lane.b32.xlu0 %v385, 16
  %v456 = vpop.permute.xlu0 %455
  %457 = vrot.lane.b32.xlu0 %v386, 16
  %v458 = vpop.permute.xlu0 %457
  %459 = vrot.lane.b32.xlu0 %v387, 16
  %v460 = vpop.permute.xlu0 %459
  %461 = vrot.lane.b32.xlu0 %v388, 16
  %v462 = vpop.permute.xlu0 %461
  %463 = vrot.lane.b32.xlu0 %v389, 16
  %v464 = vpop.permute.xlu0 %463
  %465 = vrot.lane.b32.xlu0 %v390, 16
  %v466 = vpop.permute.xlu0 %465
  %467 = vrot.lane.b32.xlu0 %v391, 16
  %v468 = vpop.permute.xlu0 %467
  %vm469 = vcmask 130048
  %v470 = vsel %vm469, %v456, %v458
  %v471 = vsel %vm469, %v458, %v460
  %v472 = vsel %vm469, %v460, %v462
  %v473 = vsel %vm469, %v462, %v464
  %v474 = vsel %vm469, %v464, %v466
  %v475 = vsel %vm469, %v466, %v468
  %v476 = vsel %vm469, %v468, %v453
  %v485 = vsel %vm469, %v453, %v456
  %v486 = vperm.slane %v345, 1
  %v487 = vperm.slane %v346, 1
  %v488 = vperm.slane %v347, 1
  %v489 = vperm.slane %v348, 1
  %v490 = vperm.slane %v349, 1
  %v491 = vperm.slane %v350, 1
  %v492 = vperm.slane %v351, 1
  %v493 = vperm.slane %v352, 1
  %v494 = vmul.f32 %v485, %v486
  %v495 = vmul.f32 %v470, %v487
  %v496 = vmul.f32 %v471, %v488
  %v497 = vmul.f32 %v472, %v489
  %v498 = vmul.f32 %v473, %v490
  %v499 = vmul.f32 %v474, %v491
  %v500 = vmul.f32 %v475, %v492
  %v501 = vmul.f32 %v476, %v493
  %502 = vrot.lane.b32.xlu0 %v392, 15
  %v503 = vpop.permute.xlu0 %502
  %505 = vrot.lane.b32.xlu0 %v385, 15
  %v506 = vpop.permute.xlu0 %505
  %507 = vrot.lane.b32.xlu0 %v386, 15
  %v508 = vpop.permute.xlu0 %507
  %509 = vrot.lane.b32.xlu0 %v387, 15
  %v510 = vpop.permute.xlu0 %509
  %511 = vrot.lane.b32.xlu0 %v388, 15
  %v512 = vpop.permute.xlu0 %511
  %513 = vrot.lane.b32.xlu0 %v389, 15
  %v514 = vpop.permute.xlu0 %513
  %515 = vrot.lane.b32.xlu0 %v390, 15
  %v516 = vpop.permute.xlu0 %515
  %517 = vrot.lane.b32.xlu0 %v391, 15
  %v518 = vpop.permute.xlu0 %517
  %vm519 = vcmask 121856
  %v520 = vsel %vm519, %v506, %v508
  %v521 = vsel %vm519, %v508, %v510
  %v522 = vsel %vm519, %v510, %v512
  %v523 = vsel %vm519, %v512, %v514
  %v524 = vsel %vm519, %v514, %v516
  %v525 = vsel %vm519, %v516, %v518
  %v526 = vsel %vm519, %v518, %v503
  %v535 = vsel %vm519, %v503, %v506
  %v536 = vperm.slane %v345, 2
  %v537 = vperm.slane %v346, 2
  %v538 = vperm.slane %v347, 2
  %v539 = vperm.slane %v348, 2
  %v540 = vperm.slane %v349, 2
  %v541 = vperm.slane %v350, 2
  %v542 = vperm.slane %v351, 2
  %v543 = vperm.slane %v352, 2
  %v544 = vmul.f32 %v535, %v536
  %v545 = vmul.f32 %v520, %v537
  %v546 = vmul.f32 %v521, %v538
  %v547 = vmul.f32 %v522, %v539
  %v548 = vmul.f32 %v523, %v540
  %v549 = vmul.f32 %v524, %v541
  %v550 = vmul.f32 %v525, %v542
  %v551 = vmul.f32 %v526, %v543
  %552 = vrot.lane.b32.xlu0 %v392, 1
  %v553 = vpop.permute.xlu0 %552
  %555 = vrot.lane.b32.xlu0 %v385, 1
  %v556 = vpop.permute.xlu0 %555
  %557 = vrot.lane.b32.xlu0 %v386, 1
  %v558 = vpop.permute.xlu0 %557
  %559 = vrot.lane.b32.xlu0 %v387, 1
  %v560 = vpop.permute.xlu0 %559
  %561 = vrot.lane.b32.xlu0 %v388, 1
  %v562 = vpop.permute.xlu0 %561
  %563 = vrot.lane.b32.xlu0 %v389, 1
  %v564 = vpop.permute.xlu0 %563
  %565 = vrot.lane.b32.xlu0 %v390, 1
  %v566 = vpop.permute.xlu0 %565
  %567 = vrot.lane.b32.xlu0 %v391, 1
  %v568 = vpop.permute.xlu0 %567
  %v569 = vsel %vm90, %v556, %v558
  %v570 = vsel %vm90, %v558, %v560
  %v571 = vsel %vm90, %v560, %v562
  %v572 = vsel %vm90, %v562, %v564
  %v573 = vsel %vm90, %v564, %v566
  %v574 = vsel %vm90, %v566, %v568
  %v575 = vsel %vm90, %v568, %v553
  %v584 = vsel %vm90, %v553, %v556
  %v585 = vperm.slane %v345, 3
  %v586 = vperm.slane %v346, 3
  %v587 = vperm.slane %v347, 3
  %v588 = vperm.slane %v348, 3
  %v589 = vperm.slane %v349, 3
  %v590 = vperm.slane %v350, 3
  %v591 = vperm.slane %v351, 3
  %v592 = vperm.slane %v352, 3
  %v593 = vmul.f32 %v584, %v585
  %v594 = vmul.f32 %v569, %v586
  %v595 = vmul.f32 %v570, %v587
  %v596 = vmul.f32 %v571, %v588
  %v597 = vmul.f32 %v572, %v589
  %v598 = vmul.f32 %v573, %v590
  %v599 = vmul.f32 %v574, %v591
  %v600 = vmul.f32 %v575, %v592
  %v601 = vperm.slane %v345, 4
  %v602 = vperm.slane %v346, 4
  %v603 = vperm.slane %v347, 4
  %v604 = vperm.slane %v348, 4
  %v605 = vperm.slane %v349, 4
  %v606 = vperm.slane %v350, 4
  %v607 = vperm.slane %v351, 4
  %v608 = vperm.slane %v352, 4
  %v609 = vmul.f32 %v385, %v601
  %v610 = vmul.f32 %v386, %v602
  %v611 = vmul.f32 %v387, %v603
  %v612 = vmul.f32 %v388, %v604
  %v613 = vmul.f32 %v389, %v605
  %v614 = vmul.f32 %v390, %v606
  %v615 = vmul.f32 %v391, %v607
  %v616 = vmul.f32 %v392, %v608
  %617 = vrot.lane.b32.xlu0 %v385, 127
  %v618 = vpop.permute.xlu0 %617
  %619 = vrot.lane.b32.xlu0 %v386, 127
  %v620 = vpop.permute.xlu0 %619
  %621 = vrot.lane.b32.xlu0 %v387, 127
  %v622 = vpop.permute.xlu0 %621
  %623 = vrot.lane.b32.xlu0 %v388, 127
  %v624 = vpop.permute.xlu0 %623
  %625 = vrot.lane.b32.xlu0 %v389, 127
  %v626 = vpop.permute.xlu0 %625
  %627 = vrot.lane.b32.xlu0 %v390, 127
  %v628 = vpop.permute.xlu0 %627
  %629 = vrot.lane.b32.xlu0 %v391, 127
  %v630 = vpop.permute.xlu0 %629
  %631 = vrot.lane.b32.xlu0 %v392, 127
  %v632 = vpop.permute.xlu0 %631
  %vm633 = vcmask 1039360
  %v634 = vsel %vm633, %v618, %v620
  %v635 = vsel %vm633, %v620, %v622
  %v636 = vsel %vm633, %v622, %v624
  %v637 = vsel %vm633, %v624, %v626
  %v638 = vsel %vm633, %v626, %v628
  %v639 = vsel %vm633, %v628, %v630
  %v640 = vsel %vm633, %v630, %v632
  %v650 = vsel %vm633, %v632, %v618
  %v651 = vperm.slane %v345, 5
  %v652 = vperm.slane %v346, 5
  %v653 = vperm.slane %v347, 5
  %v654 = vperm.slane %v348, 5
  %v655 = vperm.slane %v349, 5
  %v656 = vperm.slane %v350, 5
  %v657 = vperm.slane %v351, 5
  %v658 = vperm.slane %v352, 5
  %v659 = vmul.f32 %v634, %v651
  %v660 = vmul.f32 %v635, %v652
  %v661 = vmul.f32 %v636, %v653
  %v662 = vmul.f32 %v637, %v654
  %v663 = vmul.f32 %v638, %v655
  %v664 = vmul.f32 %v639, %v656
  %v665 = vmul.f32 %v640, %v657
  %v666 = vmul.f32 %v650, %v658
  %667 = vrot.lane.b32.xlu0 %v385, 113
  %v668 = vpop.permute.xlu0 %667
  %669 = vrot.lane.b32.xlu0 %v386, 113
  %v670 = vpop.permute.xlu0 %669
  %671 = vrot.lane.b32.xlu0 %v387, 113
  %v672 = vpop.permute.xlu0 %671
  %673 = vrot.lane.b32.xlu0 %v388, 113
  %v674 = vpop.permute.xlu0 %673
  %675 = vrot.lane.b32.xlu0 %v389, 113
  %v676 = vpop.permute.xlu0 %675
  %677 = vrot.lane.b32.xlu0 %v390, 113
  %v678 = vpop.permute.xlu0 %677
  %679 = vrot.lane.b32.xlu0 %v391, 113
  %v680 = vpop.permute.xlu0 %679
  %681 = vrot.lane.b32.xlu0 %v392, 113
  %v682 = vpop.permute.xlu0 %681
  %vm683 = vcmask 924672
  %v684 = vsel %vm683, %v668, %v670
  %v685 = vsel %vm683, %v670, %v672
  %v686 = vsel %vm683, %v672, %v674
  %v687 = vsel %vm683, %v674, %v676
  %v688 = vsel %vm683, %v676, %v678
  %v689 = vsel %vm683, %v678, %v680
  %v690 = vsel %vm683, %v680, %v682
  %v700 = vsel %vm683, %v682, %v668
  %v701 = vperm.slane %v345, 6
  %v702 = vperm.slane %v346, 6
  %v703 = vperm.slane %v347, 6
  %v704 = vperm.slane %v348, 6
  %v705 = vperm.slane %v349, 6
  %v706 = vperm.slane %v350, 6
  %v707 = vperm.slane %v351, 6
  %v708 = vperm.slane %v352, 6
  %v709 = vmul.f32 %v684, %v701
  %v710 = vmul.f32 %v685, %v702
  %v711 = vmul.f32 %v686, %v703
  %v712 = vmul.f32 %v687, %v704
  %v713 = vmul.f32 %v688, %v705
  %v714 = vmul.f32 %v689, %v706
  %v715 = vmul.f32 %v690, %v707
  %v716 = vmul.f32 %v700, %v708
  %717 = vrot.lane.b32.xlu0 %v385, 112
  %v718 = vpop.permute.xlu0 %717
  %719 = vrot.lane.b32.xlu0 %v386, 112
  %v720 = vpop.permute.xlu0 %719
  %721 = vrot.lane.b32.xlu0 %v387, 112
  %v722 = vpop.permute.xlu0 %721
  %723 = vrot.lane.b32.xlu0 %v388, 112
  %v724 = vpop.permute.xlu0 %723
  %725 = vrot.lane.b32.xlu0 %v389, 112
  %v726 = vpop.permute.xlu0 %725
  %727 = vrot.lane.b32.xlu0 %v390, 112
  %v728 = vpop.permute.xlu0 %727
  %729 = vrot.lane.b32.xlu0 %v391, 112
  %v730 = vpop.permute.xlu0 %729
  %731 = vrot.lane.b32.xlu0 %v392, 112
  %v732 = vpop.permute.xlu0 %731
  %vm733 = vcmask 916480
  %v734 = vsel %vm733, %v718, %v720
  %v735 = vsel %vm733, %v720, %v722
  %v736 = vsel %vm733, %v722, %v724
  %v737 = vsel %vm733, %v724, %v726
  %v738 = vsel %vm733, %v726, %v728
  %v739 = vsel %vm733, %v728, %v730
  %v740 = vsel %vm733, %v730, %v732
  %v750 = vsel %vm733, %v732, %v718
  %v751 = vperm.slane %v345, 7
  %v752 = vperm.slane %v346, 7
  %v753 = vperm.slane %v347, 7
  %v754 = vperm.slane %v348, 7
  %v755 = vperm.slane %v349, 7
  %v756 = vperm.slane %v350, 7
  %v757 = vperm.slane %v351, 7
  %v758 = vperm.slane %v352, 7
  %v759 = vmul.f32 %v734, %v751
  %v760 = vmul.f32 %v735, %v752
  %v761 = vmul.f32 %v736, %v753
  %v762 = vmul.f32 %v737, %v754
  %v763 = vmul.f32 %v738, %v755
  %v764 = vmul.f32 %v739, %v756
  %v765 = vmul.f32 %v740, %v757
  %v766 = vmul.f32 %v750, %v758
  %767 = vrot.lane.b32.xlu0 %v385, 111
  %v768 = vpop.permute.xlu0 %767
  %769 = vrot.lane.b32.xlu0 %v386, 111
  %v770 = vpop.permute.xlu0 %769
  %771 = vrot.lane.b32.xlu0 %v387, 111
  %v772 = vpop.permute.xlu0 %771
  %773 = vrot.lane.b32.xlu0 %v388, 111
  %v774 = vpop.permute.xlu0 %773
  %775 = vrot.lane.b32.xlu0 %v389, 111
  %v776 = vpop.permute.xlu0 %775
  %777 = vrot.lane.b32.xlu0 %v390, 111
  %v778 = vpop.permute.xlu0 %777
  %779 = vrot.lane.b32.xlu0 %v391, 111
  %v780 = vpop.permute.xlu0 %779
  %781 = vrot.lane.b32.xlu0 %v392, 111
  %v782 = vpop.permute.xlu0 %781
  %vm783 = vcmask 908288
  %v784 = vsel %vm783, %v768, %v770
  %v785 = vsel %vm783, %v770, %v772
  %v786 = vsel %vm783, %v772, %v774
  %v787 = vsel %vm783, %v774, %v776
  %v788 = vsel %vm783, %v776, %v778
  %v789 = vsel %vm783, %v778, %v780
  %v790 = vsel %vm783, %v780, %v782
  %v800 = vsel %vm783, %v782, %v768
  %v801 = vperm.slane %v353, 0
  %v802 = vperm.slane %v354, 0
  %v803 = vperm.slane %v355, 0
  %v804 = vperm.slane %v356, 0
  %v805 = vperm.slane %v357, 0
  %v806 = vperm.slane %v358, 0
  %v807 = vperm.slane %v359, 0
  %v808 = vperm.slane %v360, 0
  %v809 = vmul.f32 %v784, %v801
  %v810 = vmul.f32 %v785, %v802
  %v811 = vmul.f32 %v786, %v803
  %v812 = vmul.f32 %v787, %v804
  %v813 = vmul.f32 %v788, %v805
  %v814 = vmul.f32 %v789, %v806
  %v815 = vmul.f32 %v790, %v807
  %v816 = vmul.f32 %v800, %v808
  %817 = vset.pattern.permute.xlu0 3
  %818 = vperm.xlu0 %817, %v32
  %v819 = vpop.permute.xlu0 %818
  %v822 = vsel %vm141, %v393, 0
  %824 = vmatpush.msra.mxu0 0.0
  %825 = vmatpush.msra.mxu0 0.0
  %826 = vmatpush.msra.mxu0 0.0
  %827 = vmatpush.msra.mxu0 0.0
  %828 = vmatpush.msra.mxu0 0.0
  %829 = vmatpush.msra.mxu0 0.0
  %830 = vmatpush.msra.mxu0 0.0
  %831 = vmatpush.msra.mxu0 %v809
  %832 = vmatpush.msra.mxu0 %v759
  %833 = vmatpush.msra.mxu0 %v709
  %834 = vmatpush.msra.mxu0 %v659
  %835 = vmatpush.msra.mxu0 %v609
  %836 = vmatpush.msra.mxu0 %v593
  %837 = vmatpush.msra.mxu0 %v544
  %838 = vmatpush.msra.mxu0 %v494
  %839 = vmatpush.msra.mxu0 %v444
  %840 = vmatmul.f32.gmra.mxu0 %v822
  %v841 = vpop.f32.mrf.mxu0
  %v842 = vadd.f32 %v819, %v841
  %843 = vdwg.mxu0
  %844 = vmatpush.msra.mxu0 0.0
  %845 = vmatpush.msra.mxu0 0.0
  %846 = vmatpush.msra.mxu0 0.0
  %847 = vmatpush.msra.mxu0 0.0
  %848 = vmatpush.msra.mxu0 0.0
  %849 = vmatpush.msra.mxu0 0.0
  %850 = vmatpush.msra.mxu0 0.0
  %851 = vmatpush.msra.mxu0 %v810
  %852 = vmatpush.msra.mxu0 %v760
  %853 = vmatpush.msra.mxu0 %v710
  %854 = vmatpush.msra.mxu0 %v660
  %855 = vmatpush.msra.mxu0 %v610
  %856 = vmatpush.msra.mxu0 %v594
  %857 = vmatpush.msra.mxu0 %v545
  %858 = vmatpush.msra.mxu0 %v495
  %859 = vmatpush.msra.mxu0 %v445
  %860 = vmatmul.f32.gmra.mxu0 %v822
  %v861 = vpop.f32.mrf.mxu0
  %v862 = vadd.f32 %v819, %v861
  %863 = vdwg.mxu0
  %864 = vmatpush.msra.mxu0 0.0
  %865 = vmatpush.msra.mxu0 0.0
  %866 = vmatpush.msra.mxu0 0.0
  %867 = vmatpush.msra.mxu0 0.0
  %868 = vmatpush.msra.mxu0 0.0
  %869 = vmatpush.msra.mxu0 0.0
  %870 = vmatpush.msra.mxu0 0.0
  %871 = vmatpush.msra.mxu0 %v811
  %872 = vmatpush.msra.mxu0 %v761
  %873 = vmatpush.msra.mxu0 %v711
  %874 = vmatpush.msra.mxu0 %v661
  %875 = vmatpush.msra.mxu0 %v611
  %876 = vmatpush.msra.mxu0 %v595
  %877 = vmatpush.msra.mxu0 %v546
  %878 = vmatpush.msra.mxu0 %v496
  %879 = vmatpush.msra.mxu0 %v446
  %880 = vmatmul.f32.gmra.mxu0 %v822
  %v881 = vpop.f32.mrf.mxu0
  %v882 = vadd.f32 %v819, %v881
  %883 = vdwg.mxu0
  %884 = vmatpush.msra.mxu0 0.0
  %885 = vmatpush.msra.mxu0 0.0
  %886 = vmatpush.msra.mxu0 0.0
  %887 = vmatpush.msra.mxu0 0.0
  %888 = vmatpush.msra.mxu0 0.0
  %889 = vmatpush.msra.mxu0 0.0
  %890 = vmatpush.msra.mxu0 0.0
  %891 = vmatpush.msra.mxu0 %v812
  %892 = vmatpush.msra.mxu0 %v762
  %893 = vmatpush.msra.mxu0 %v712
  %894 = vmatpush.msra.mxu0 %v662
  %895 = vmatpush.msra.mxu0 %v612
  %896 = vmatpush.msra.mxu0 %v596
  %897 = vmatpush.msra.mxu0 %v547
  %898 = vmatpush.msra.mxu0 %v497
  %899 = vmatpush.msra.mxu0 %v447
  %900 = vmatmul.f32.gmra.mxu0 %v822
  %v901 = vpop.f32.mrf.mxu0
  %v902 = vadd.f32 %v819, %v901
  %903 = vdwg.mxu0
  %904 = vmatpush.msra.mxu0 0.0
  %905 = vmatpush.msra.mxu0 0.0
  %906 = vmatpush.msra.mxu0 0.0
  %907 = vmatpush.msra.mxu0 0.0
  %908 = vmatpush.msra.mxu0 0.0
  %909 = vmatpush.msra.mxu0 0.0
  %910 = vmatpush.msra.mxu0 0.0
  %911 = vmatpush.msra.mxu0 %v813
  %912 = vmatpush.msra.mxu0 %v763
  %913 = vmatpush.msra.mxu0 %v713
  %914 = vmatpush.msra.mxu0 %v663
  %915 = vmatpush.msra.mxu0 %v613
  %916 = vmatpush.msra.mxu0 %v597
  %917 = vmatpush.msra.mxu0 %v548
  %918 = vmatpush.msra.mxu0 %v498
  %919 = vmatpush.msra.mxu0 %v448
  %920 = vmatmul.f32.gmra.mxu0 %v822
  %v921 = vpop.f32.mrf.mxu0
  %v922 = vadd.f32 %v819, %v921
  %923 = vdwg.mxu0
  %924 = vmatpush.msra.mxu0 0.0
  %925 = vmatpush.msra.mxu0 0.0
  %926 = vmatpush.msra.mxu0 0.0
  %927 = vmatpush.msra.mxu0 0.0
  %928 = vmatpush.msra.mxu0 0.0
  %929 = vmatpush.msra.mxu0 0.0
  %930 = vmatpush.msra.mxu0 0.0
  %931 = vmatpush.msra.mxu0 %v814
  %932 = vmatpush.msra.mxu0 %v764
  %933 = vmatpush.msra.mxu0 %v714
  %934 = vmatpush.msra.mxu0 %v664
  %935 = vmatpush.msra.mxu0 %v614
  %936 = vmatpush.msra.mxu0 %v598
  %937 = vmatpush.msra.mxu0 %v549
  %938 = vmatpush.msra.mxu0 %v499
  %939 = vmatpush.msra.mxu0 %v449
  %940 = vmatmul.f32.gmra.mxu0 %v822
  %v941 = vpop.f32.mrf.mxu0
  %v942 = vadd.f32 %v819, %v941
  %943 = vdwg.mxu0
  %944 = vmatpush.msra.mxu0 0.0
  %945 = vmatpush.msra.mxu0 0.0
  %946 = vmatpush.msra.mxu0 0.0
  %947 = vmatpush.msra.mxu0 0.0
  %948 = vmatpush.msra.mxu0 0.0
  %949 = vmatpush.msra.mxu0 0.0
  %950 = vmatpush.msra.mxu0 0.0
  %951 = vmatpush.msra.mxu0 %v815
  %952 = vmatpush.msra.mxu0 %v765
  %953 = vmatpush.msra.mxu0 %v715
  %954 = vmatpush.msra.mxu0 %v665
  %955 = vmatpush.msra.mxu0 %v615
  %956 = vmatpush.msra.mxu0 %v599
  %957 = vmatpush.msra.mxu0 %v550
  %958 = vmatpush.msra.mxu0 %v500
  %959 = vmatpush.msra.mxu0 %v450
  %960 = vmatmul.f32.gmra.mxu0 %v822
  %v961 = vpop.f32.mrf.mxu0
  %v962 = vadd.f32 %v819, %v961
  %963 = vdwg.mxu0
  %964 = vmatpush.msra.mxu0 0.0
  %965 = vmatpush.msra.mxu0 0.0
  %966 = vmatpush.msra.mxu0 0.0
  %967 = vmatpush.msra.mxu0 0.0
  %968 = vmatpush.msra.mxu0 0.0
  %969 = vmatpush.msra.mxu0 0.0
  %970 = vmatpush.msra.mxu0 0.0
  %971 = vmatpush.msra.mxu0 %v816
  %972 = vmatpush.msra.mxu0 %v766
  %973 = vmatpush.msra.mxu0 %v716
  %974 = vmatpush.msra.mxu0 %v666
  %975 = vmatpush.msra.mxu0 %v616
  %976 = vmatpush.msra.mxu0 %v600
  %977 = vmatpush.msra.mxu0 %v551
  %978 = vmatpush.msra.mxu0 %v501
  %979 = vmatpush.msra.mxu0 %v451
  %980 = vmatmul.f32.gmra.mxu0 %v822
  %v981 = vpop.f32.mrf.mxu0
  %v982 = vadd.f32 %v819, %v981
  %983 = vdwg.mxu0
  %984 = vset.pattern.permute.xlu0 4
  %985 = vperm.xlu0 %984, %v32
  %v986 = vpop.permute.xlu0 %985
  %v988 = vmul.f32 %v842, %v986
  %v989 = vmul.f32 %v862, %v986
  %v990 = vmul.f32 %v882, %v986
  %v991 = vmul.f32 %v902, %v986
  %v992 = vmul.f32 %v922, %v986
  %v993 = vmul.f32 %v942, %v986
  %v994 = vmul.f32 %v962, %v986
  %v995 = vmul.f32 %v982, %v986
  %996 = vset.pattern.permute.xlu0 5
  %997 = vperm.xlu0 %996, %v32
  %v998 = vpop.permute.xlu0 %997
  %v1000 = vadd.f32 %v988, %v998
  %v1001 = vadd.f32 %v989, %v998
  %v1002 = vadd.f32 %v990, %v998
  %v1003 = vadd.f32 %v991, %v998
  %v1004 = vadd.f32 %v992, %v998
  %v1005 = vadd.f32 %v993, %v998
  %v1006 = vadd.f32 %v994, %v998
  %v1007 = vadd.f32 %v995, %v998
  %v1008 = vtanh.pop %v1000
  %v1009 = vtanh.pop %v1001
  %v1010 = vtanh.pop %v1002
  %v1011 = vtanh.pop %v1003
  %v1012 = vtanh.pop %v1004
  %v1013 = vtanh.pop %v1005
  %v1014 = vtanh.pop %v1006
  %v1015 = vtanh.pop %v1007
  %v1016 = vld [vmem:[%s7] sm:$0xff]
  %1018 = vrot.lane.b32.xlu0 %v1015, 17
  %v1019 = vpop.permute.xlu0 %1018
  %1028 = vrot.lane.b32.xlu0 %v1008, 17
  %v1029 = vpop.permute.xlu0 %1028
  %1030 = vrot.lane.b32.xlu0 %v1009, 17
  %v1031 = vpop.permute.xlu0 %1030
  %1032 = vrot.lane.b32.xlu0 %v1010, 17
  %v1033 = vpop.permute.xlu0 %1032
  %1034 = vrot.lane.b32.xlu0 %v1011, 17
  %v1035 = vpop.permute.xlu0 %1034
  %1036 = vrot.lane.b32.xlu0 %v1012, 17
  %v1037 = vpop.permute.xlu0 %1036
  %1038 = vrot.lane.b32.xlu0 %v1013, 17
  %v1039 = vpop.permute.xlu0 %1038
  %1040 = vrot.lane.b32.xlu0 %v1014, 17
  %v1041 = vpop.permute.xlu0 %1040
  %v1042 = vsel %vm419, %v1029, %v1031
  %v1043 = vsel %vm419, %v1031, %v1033
  %v1044 = vsel %vm419, %v1033, %v1035
  %v1045 = vsel %vm419, %v1035, %v1037
  %v1046 = vsel %vm419, %v1037, %v1039
  %v1047 = vsel %vm419, %v1039, %v1041
  %v1048 = vsel %vm419, %v1041, %v1019
  %v1057 = vsel %vm419, %v1019, %v1029
  %v1058 = vmul.f32 %v1057, %v436
  %v1059 = vmul.f32 %v1042, %v437
  %v1060 = vmul.f32 %v1043, %v438
  %v1061 = vmul.f32 %v1044, %v439
  %v1062 = vmul.f32 %v1045, %v440
  %v1063 = vmul.f32 %v1046, %v441
  %v1064 = vmul.f32 %v1047, %v442
  %v1065 = vmul.f32 %v1048, %v443
  %1066 = vrot.lane.b32.xlu0 %v1015, 16
  %v1067 = vpop.permute.xlu0 %1066
  %1069 = vrot.lane.b32.xlu0 %v1008, 16
  %v1070 = vpop.permute.xlu0 %1069
  %1071 = vrot.lane.b32.xlu0 %v1009, 16
  %v1072 = vpop.permute.xlu0 %1071
  %1073 = vrot.lane.b32.xlu0 %v1010, 16
  %v1074 = vpop.permute.xlu0 %1073
  %1075 = vrot.lane.b32.xlu0 %v1011, 16
  %v1076 = vpop.permute.xlu0 %1075
  %1077 = vrot.lane.b32.xlu0 %v1012, 16
  %v1078 = vpop.permute.xlu0 %1077
  %1079 = vrot.lane.b32.xlu0 %v1013, 16
  %v1080 = vpop.permute.xlu0 %1079
  %1081 = vrot.lane.b32.xlu0 %v1014, 16
  %v1082 = vpop.permute.xlu0 %1081
  %v1083 = vsel %vm469, %v1070, %v1072
  %v1084 = vsel %vm469, %v1072, %v1074
  %v1085 = vsel %vm469, %v1074, %v1076
  %v1086 = vsel %vm469, %v1076, %v1078
  %v1087 = vsel %vm469, %v1078, %v1080
  %v1088 = vsel %vm469, %v1080, %v1082
  %v1089 = vsel %vm469, %v1082, %v1067
  %v1098 = vsel %vm469, %v1067, %v1070
  %v1099 = vmul.f32 %v1098, %v486
  %v1100 = vmul.f32 %v1083, %v487
  %v1101 = vmul.f32 %v1084, %v488
  %v1102 = vmul.f32 %v1085, %v489
  %v1103 = vmul.f32 %v1086, %v490
  %v1104 = vmul.f32 %v1087, %v491
  %v1105 = vmul.f32 %v1088, %v492
  %v1106 = vmul.f32 %v1089, %v493
  %1107 = vrot.lane.b32.xlu0 %v1015, 15
  %v1108 = vpop.permute.xlu0 %1107
  %1110 = vrot.lane.b32.xlu0 %v1008, 15
  %v1111 = vpop.permute.xlu0 %1110
  %1112 = vrot.lane.b32.xlu0 %v1009, 15
  %v1113 = vpop.permute.xlu0 %1112
  %1114 = vrot.lane.b32.xlu0 %v1010, 15
  %v1115 = vpop.permute.xlu0 %1114
  %1116 = vrot.lane.b32.xlu0 %v1011, 15
  %v1117 = vpop.permute.xlu0 %1116
  %1118 = vrot.lane.b32.xlu0 %v1012, 15
  %v1119 = vpop.permute.xlu0 %1118
  %1120 = vrot.lane.b32.xlu0 %v1013, 15
  %v1121 = vpop.permute.xlu0 %1120
  %1122 = vrot.lane.b32.xlu0 %v1014, 15
  %v1123 = vpop.permute.xlu0 %1122
  %v1124 = vsel %vm519, %v1111, %v1113
  %v1125 = vsel %vm519, %v1113, %v1115
  %v1126 = vsel %vm519, %v1115, %v1117
  %v1127 = vsel %vm519, %v1117, %v1119
  %v1128 = vsel %vm519, %v1119, %v1121
  %v1129 = vsel %vm519, %v1121, %v1123
  %v1130 = vsel %vm519, %v1123, %v1108
  %v1139 = vsel %vm519, %v1108, %v1111
  %v1140 = vmul.f32 %v1139, %v536
  %v1141 = vmul.f32 %v1124, %v537
  %v1142 = vmul.f32 %v1125, %v538
  %v1143 = vmul.f32 %v1126, %v539
  %v1144 = vmul.f32 %v1127, %v540
  %v1145 = vmul.f32 %v1128, %v541
  %v1146 = vmul.f32 %v1129, %v542
  %v1147 = vmul.f32 %v1130, %v543
  %1148 = vrot.lane.b32.xlu0 %v1015, 1
  %v1149 = vpop.permute.xlu0 %1148
  %1151 = vrot.lane.b32.xlu0 %v1008, 1
  %v1152 = vpop.permute.xlu0 %1151
  %1153 = vrot.lane.b32.xlu0 %v1009, 1
  %v1154 = vpop.permute.xlu0 %1153
  %1155 = vrot.lane.b32.xlu0 %v1010, 1
  %v1156 = vpop.permute.xlu0 %1155
  %1157 = vrot.lane.b32.xlu0 %v1011, 1
  %v1158 = vpop.permute.xlu0 %1157
  %1159 = vrot.lane.b32.xlu0 %v1012, 1
  %v1160 = vpop.permute.xlu0 %1159
  %1161 = vrot.lane.b32.xlu0 %v1013, 1
  %v1162 = vpop.permute.xlu0 %1161
  %1163 = vrot.lane.b32.xlu0 %v1014, 1
  %v1164 = vpop.permute.xlu0 %1163
  %v1165 = vsel %vm90, %v1152, %v1154
  %v1166 = vsel %vm90, %v1154, %v1156
  %v1167 = vsel %vm90, %v1156, %v1158
  %v1168 = vsel %vm90, %v1158, %v1160
  %v1169 = vsel %vm90, %v1160, %v1162
  %v1170 = vsel %vm90, %v1162, %v1164
  %v1171 = vsel %vm90, %v1164, %v1149
  %v1180 = vsel %vm90, %v1149, %v1152
  %v1181 = vmul.f32 %v1180, %v585
  %v1182 = vmul.f32 %v1165, %v586
  %v1183 = vmul.f32 %v1166, %v587
  %v1184 = vmul.f32 %v1167, %v588
  %v1185 = vmul.f32 %v1168, %v589
  %v1186 = vmul.f32 %v1169, %v590
  %v1187 = vmul.f32 %v1170, %v591
  %v1188 = vmul.f32 %v1171, %v592
  %v1189 = vmul.f32 %v1008, %v601
  %v1190 = vmul.f32 %v1009, %v602
  %v1191 = vmul.f32 %v1010, %v603
  %v1192 = vmul.f32 %v1011, %v604
  %v1193 = vmul.f32 %v1012, %v605
  %v1194 = vmul.f32 %v1013, %v606
  %v1195 = vmul.f32 %v1014, %v607
  %v1196 = vmul.f32 %v1015, %v608
  %1197 = vrot.lane.b32.xlu0 %v1008, 127
  %v1198 = vpop.permute.xlu0 %1197
  %1199 = vrot.lane.b32.xlu0 %v1009, 127
  %v1200 = vpop.permute.xlu0 %1199
  %1201 = vrot.lane.b32.xlu0 %v1010, 127
  %v1202 = vpop.permute.xlu0 %1201
  %1203 = vrot.lane.b32.xlu0 %v1011, 127
  %v1204 = vpop.permute.xlu0 %1203
  %1205 = vrot.lane.b32.xlu0 %v1012, 127
  %v1206 = vpop.permute.xlu0 %1205
  %1207 = vrot.lane.b32.xlu0 %v1013, 127
  %v1208 = vpop.permute.xlu0 %1207
  %1209 = vrot.lane.b32.xlu0 %v1014, 127
  %v1210 = vpop.permute.xlu0 %1209
  %1211 = vrot.lane.b32.xlu0 %v1015, 127
  %v1212 = vpop.permute.xlu0 %1211
  %v1213 = vsel %vm633, %v1198, %v1200
  %v1214 = vsel %vm633, %v1200, %v1202
  %v1215 = vsel %vm633, %v1202, %v1204
  %v1216 = vsel %vm633, %v1204, %v1206
  %v1217 = vsel %vm633, %v1206, %v1208
  %v1218 = vsel %vm633, %v1208, %v1210
  %v1219 = vsel %vm633, %v1210, %v1212
  %v1229 = vsel %vm633, %v1212, %v1198
  %v1230 = vmul.f32 %v1213, %v651
  %v1231 = vmul.f32 %v1214, %v652
  %v1232 = vmul.f32 %v1215, %v653
  %v1233 = vmul.f32 %v1216, %v654
  %v1234 = vmul.f32 %v1217, %v655
  %v1235 = vmul.f32 %v1218, %v656
  %v1236 = vmul.f32 %v1219, %v657
  %v1237 = vmul.f32 %v1229, %v658
  %1238 = vrot.lane.b32.xlu0 %v1008, 113
  %v1239 = vpop.permute.xlu0 %1238
  %1240 = vrot.lane.b32.xlu0 %v1009, 113
  %v1241 = vpop.permute.xlu0 %1240
  %1242 = vrot.lane.b32.xlu0 %v1010, 113
  %v1243 = vpop.permute.xlu0 %1242
  %1244 = vrot.lane.b32.xlu0 %v1011, 113
  %v1245 = vpop.permute.xlu0 %1244
  %1246 = vrot.lane.b32.xlu0 %v1012, 113
  %v1247 = vpop.permute.xlu0 %1246
  %1248 = vrot.lane.b32.xlu0 %v1013, 113
  %v1249 = vpop.permute.xlu0 %1248
  %1250 = vrot.lane.b32.xlu0 %v1014, 113
  %v1251 = vpop.permute.xlu0 %1250
  %1252 = vrot.lane.b32.xlu0 %v1015, 113
  %v1253 = vpop.permute.xlu0 %1252
  %v1254 = vsel %vm683, %v1239, %v1241
  %v1255 = vsel %vm683, %v1241, %v1243
  %v1256 = vsel %vm683, %v1243, %v1245
  %v1257 = vsel %vm683, %v1245, %v1247
  %v1258 = vsel %vm683, %v1247, %v1249
  %v1259 = vsel %vm683, %v1249, %v1251
  %v1260 = vsel %vm683, %v1251, %v1253
  %v1270 = vsel %vm683, %v1253, %v1239
  %v1271 = vmul.f32 %v1254, %v701
  %v1272 = vmul.f32 %v1255, %v702
  %v1273 = vmul.f32 %v1256, %v703
  %v1274 = vmul.f32 %v1257, %v704
  %v1275 = vmul.f32 %v1258, %v705
  %v1276 = vmul.f32 %v1259, %v706
  %v1277 = vmul.f32 %v1260, %v707
  %v1278 = vmul.f32 %v1270, %v708
  %1279 = vrot.lane.b32.xlu0 %v1008, 112
  %v1280 = vpop.permute.xlu0 %1279
  %1281 = vrot.lane.b32.xlu0 %v1009, 112
  %v1282 = vpop.permute.xlu0 %1281
  %1283 = vrot.lane.b32.xlu0 %v1010, 112
  %v1284 = vpop.permute.xlu0 %1283
  %1285 = vrot.lane.b32.xlu0 %v1011, 112
  %v1286 = vpop.permute.xlu0 %1285
  %1287 = vrot.lane.b32.xlu0 %v1012, 112
  %v1288 = vpop.permute.xlu0 %1287
  %1289 = vrot.lane.b32.xlu0 %v1013, 112
  %v1290 = vpop.permute.xlu0 %1289
  %1291 = vrot.lane.b32.xlu0 %v1014, 112
  %v1292 = vpop.permute.xlu0 %1291
  %1293 = vrot.lane.b32.xlu0 %v1015, 112
  %v1294 = vpop.permute.xlu0 %1293
  %v1295 = vsel %vm733, %v1280, %v1282
  %v1296 = vsel %vm733, %v1282, %v1284
  %v1297 = vsel %vm733, %v1284, %v1286
  %v1298 = vsel %vm733, %v1286, %v1288
  %v1299 = vsel %vm733, %v1288, %v1290
  %v1300 = vsel %vm733, %v1290, %v1292
  %v1301 = vsel %vm733, %v1292, %v1294
  %v1311 = vsel %vm733, %v1294, %v1280
  %v1312 = vmul.f32 %v1295, %v751
  %v1313 = vmul.f32 %v1296, %v752
  %v1314 = vmul.f32 %v1297, %v753
  %v1315 = vmul.f32 %v1298, %v754
  %v1316 = vmul.f32 %v1299, %v755
  %v1317 = vmul.f32 %v1300, %v756
  %v1318 = vmul.f32 %v1301, %v757
  %v1319 = vmul.f32 %v1311, %v758
  %1320 = vrot.lane.b32.xlu0 %v1008, 111
  %v1321 = vpop.permute.xlu0 %1320
  %1322 = vrot.lane.b32.xlu0 %v1009, 111
  %v1323 = vpop.permute.xlu0 %1322
  %1324 = vrot.lane.b32.xlu0 %v1010, 111
  %v1325 = vpop.permute.xlu0 %1324
  %1326 = vrot.lane.b32.xlu0 %v1011, 111
  %v1327 = vpop.permute.xlu0 %1326
  %1328 = vrot.lane.b32.xlu0 %v1012, 111
  %v1329 = vpop.permute.xlu0 %1328
  %1330 = vrot.lane.b32.xlu0 %v1013, 111
  %v1331 = vpop.permute.xlu0 %1330
  %1332 = vrot.lane.b32.xlu0 %v1014, 111
  %v1333 = vpop.permute.xlu0 %1332
  %1334 = vrot.lane.b32.xlu0 %v1015, 111
  %v1335 = vpop.permute.xlu0 %1334
  %v1336 = vsel %vm783, %v1321, %v1323
  %v1337 = vsel %vm783, %v1323, %v1325
  %v1338 = vsel %vm783, %v1325, %v1327
  %v1339 = vsel %vm783, %v1327, %v1329
  %v1340 = vsel %vm783, %v1329, %v1331
  %v1341 = vsel %vm783, %v1331, %v1333
  %v1342 = vsel %vm783, %v1333, %v1335
  %v1352 = vsel %vm783, %v1335, %v1321
  %v1353 = vmul.f32 %v1336, %v801
  %v1354 = vmul.f32 %v1337, %v802
  %v1355 = vmul.f32 %v1338, %v803
  %v1356 = vmul.f32 %v1339, %v804
  %v1357 = vmul.f32 %v1340, %v805
  %v1358 = vmul.f32 %v1341, %v806
  %v1359 = vmul.f32 %v1342, %v807
  %v1360 = vmul.f32 %v1352, %v808
  %1361 = vset.pattern.permute.xlu0 6
  %1362 = vperm.xlu0 %1361, %v32
  %v1363 = vpop.permute.xlu0 %1362
  %v1366 = vsel %vm141, %v1016, 0
  %1368 = vmatpush.msra.mxu0 0.0
  %1369 = vmatpush.msra.mxu0 0.0
  %1370 = vmatpush.msra.mxu0 0.0
  %1371 = vmatpush.msra.mxu0 0.0
  %1372 = vmatpush.msra.mxu0 0.0
  %1373 = vmatpush.msra.mxu0 0.0
  %1374 = vmatpush.msra.mxu0 0.0
  %1375 = vmatpush.msra.mxu0 %v1353
  %1376 = vmatpush.msra.mxu0 %v1312
  %1377 = vmatpush.msra.mxu0 %v1271
  %1378 = vmatpush.msra.mxu0 %v1230
  %1379 = vmatpush.msra.mxu0 %v1189
  %1380 = vmatpush.msra.mxu0 %v1181
  %1381 = vmatpush.msra.mxu0 %v1140
  %1382 = vmatpush.msra.mxu0 %v1099
  %1383 = vmatpush.msra.mxu0 %v1058
  %1384 = vmatmul.f32.gmra.mxu0 %v1366
  %v1385 = vpop.f32.mrf.mxu0
  %v1386 = vadd.f32 %v1363, %v1385
  %1387 = vdwg.mxu0
  %1388 = vmatpush.msra.mxu0 0.0
  %1389 = vmatpush.msra.mxu0 0.0
  %1390 = vmatpush.msra.mxu0 0.0
  %1391 = vmatpush.msra.mxu0 0.0
  %1392 = vmatpush.msra.mxu0 0.0
  %1393 = vmatpush.msra.mxu0 0.0
  %1394 = vmatpush.msra.mxu0 0.0
  %1395 = vmatpush.msra.mxu0 %v1354
  %1396 = vmatpush.msra.mxu0 %v1313
  %1397 = vmatpush.msra.mxu0 %v1272
  %1398 = vmatpush.msra.mxu0 %v1231
  %1399 = vmatpush.msra.mxu0 %v1190
  %1400 = vmatpush.msra.mxu0 %v1182
  %1401 = vmatpush.msra.mxu0 %v1141
  %1402 = vmatpush.msra.mxu0 %v1100
  %1403 = vmatpush.msra.mxu0 %v1059
  %1404 = vmatmul.f32.gmra.mxu0 %v1366
  %v1405 = vpop.f32.mrf.mxu0
  %v1406 = vadd.f32 %v1363, %v1405
  %1407 = vdwg.mxu0
  %1408 = vmatpush.msra.mxu0 0.0
  %1409 = vmatpush.msra.mxu0 0.0
  %1410 = vmatpush.msra.mxu0 0.0
  %1411 = vmatpush.msra.mxu0 0.0
  %1412 = vmatpush.msra.mxu0 0.0
  %1413 = vmatpush.msra.mxu0 0.0
  %1414 = vmatpush.msra.mxu0 0.0
  %1415 = vmatpush.msra.mxu0 %v1355
  %1416 = vmatpush.msra.mxu0 %v1314
  %1417 = vmatpush.msra.mxu0 %v1273
  %1418 = vmatpush.msra.mxu0 %v1232
  %1419 = vmatpush.msra.mxu0 %v1191
  %1420 = vmatpush.msra.mxu0 %v1183
  %1421 = vmatpush.msra.mxu0 %v1142
  %1422 = vmatpush.msra.mxu0 %v1101
  %1423 = vmatpush.msra.mxu0 %v1060
  %1424 = vmatmul.f32.gmra.mxu0 %v1366
  %v1425 = vpop.f32.mrf.mxu0
  %v1426 = vadd.f32 %v1363, %v1425
  %1427 = vdwg.mxu0
  %1428 = vmatpush.msra.mxu0 0.0
  %1429 = vmatpush.msra.mxu0 0.0
  %1430 = vmatpush.msra.mxu0 0.0
  %1431 = vmatpush.msra.mxu0 0.0
  %1432 = vmatpush.msra.mxu0 0.0
  %1433 = vmatpush.msra.mxu0 0.0
  %1434 = vmatpush.msra.mxu0 0.0
  %1435 = vmatpush.msra.mxu0 %v1356
  %1436 = vmatpush.msra.mxu0 %v1315
  %1437 = vmatpush.msra.mxu0 %v1274
  %1438 = vmatpush.msra.mxu0 %v1233
  %1439 = vmatpush.msra.mxu0 %v1192
  %1440 = vmatpush.msra.mxu0 %v1184
  %1441 = vmatpush.msra.mxu0 %v1143
  %1442 = vmatpush.msra.mxu0 %v1102
  %1443 = vmatpush.msra.mxu0 %v1061
  %1444 = vmatmul.f32.gmra.mxu0 %v1366
  %v1445 = vpop.f32.mrf.mxu0
  %v1446 = vadd.f32 %v1363, %v1445
  %1447 = vdwg.mxu0
  %1448 = vmatpush.msra.mxu0 0.0
  %1449 = vmatpush.msra.mxu0 0.0
  %1450 = vmatpush.msra.mxu0 0.0
  %1451 = vmatpush.msra.mxu0 0.0
  %1452 = vmatpush.msra.mxu0 0.0
  %1453 = vmatpush.msra.mxu0 0.0
  %1454 = vmatpush.msra.mxu0 0.0
  %1455 = vmatpush.msra.mxu0 %v1357
  %1456 = vmatpush.msra.mxu0 %v1316
  %1457 = vmatpush.msra.mxu0 %v1275
  %1458 = vmatpush.msra.mxu0 %v1234
  %1459 = vmatpush.msra.mxu0 %v1193
  %1460 = vmatpush.msra.mxu0 %v1185
  %1461 = vmatpush.msra.mxu0 %v1144
  %1462 = vmatpush.msra.mxu0 %v1103
  %1463 = vmatpush.msra.mxu0 %v1062
  %1464 = vmatmul.f32.gmra.mxu0 %v1366
  %v1465 = vpop.f32.mrf.mxu0
  %v1466 = vadd.f32 %v1363, %v1465
  %1467 = vdwg.mxu0
  %1468 = vmatpush.msra.mxu0 0.0
  %1469 = vmatpush.msra.mxu0 0.0
  %1470 = vmatpush.msra.mxu0 0.0
  %1471 = vmatpush.msra.mxu0 0.0
  %1472 = vmatpush.msra.mxu0 0.0
  %1473 = vmatpush.msra.mxu0 0.0
  %1474 = vmatpush.msra.mxu0 0.0
  %1475 = vmatpush.msra.mxu0 %v1358
  %1476 = vmatpush.msra.mxu0 %v1317
  %1477 = vmatpush.msra.mxu0 %v1276
  %1478 = vmatpush.msra.mxu0 %v1235
  %1479 = vmatpush.msra.mxu0 %v1194
  %1480 = vmatpush.msra.mxu0 %v1186
  %1481 = vmatpush.msra.mxu0 %v1145
  %1482 = vmatpush.msra.mxu0 %v1104
  %1483 = vmatpush.msra.mxu0 %v1063
  %1484 = vmatmul.f32.gmra.mxu0 %v1366
  %v1485 = vpop.f32.mrf.mxu0
  %v1486 = vadd.f32 %v1363, %v1485
  %1487 = vdwg.mxu0
  %1488 = vmatpush.msra.mxu0 0.0
  %1489 = vmatpush.msra.mxu0 0.0
  %1490 = vmatpush.msra.mxu0 0.0
  %1491 = vmatpush.msra.mxu0 0.0
  %1492 = vmatpush.msra.mxu0 0.0
  %1493 = vmatpush.msra.mxu0 0.0
  %1494 = vmatpush.msra.mxu0 0.0
  %1495 = vmatpush.msra.mxu0 %v1359
  %1496 = vmatpush.msra.mxu0 %v1318
  %1497 = vmatpush.msra.mxu0 %v1277
  %1498 = vmatpush.msra.mxu0 %v1236
  %1499 = vmatpush.msra.mxu0 %v1195
  %1500 = vmatpush.msra.mxu0 %v1187
  %1501 = vmatpush.msra.mxu0 %v1146
  %1502 = vmatpush.msra.mxu0 %v1105
  %1503 = vmatpush.msra.mxu0 %v1064
  %1504 = vmatmul.f32.gmra.mxu0 %v1366
  %v1505 = vpop.f32.mrf.mxu0
  %v1506 = vadd.f32 %v1363, %v1505
  %1507 = vdwg.mxu0
  %1508 = vmatpush.msra.mxu0 0.0
  %1509 = vmatpush.msra.mxu0 0.0
  %1510 = vmatpush.msra.mxu0 0.0
  %1511 = vmatpush.msra.mxu0 0.0
  %1512 = vmatpush.msra.mxu0 0.0
  %1513 = vmatpush.msra.mxu0 0.0
  %1514 = vmatpush.msra.mxu0 0.0
  %1515 = vmatpush.msra.mxu0 %v1360
  %1516 = vmatpush.msra.mxu0 %v1319
  %1517 = vmatpush.msra.mxu0 %v1278
  %1518 = vmatpush.msra.mxu0 %v1237
  %1519 = vmatpush.msra.mxu0 %v1196
  %1520 = vmatpush.msra.mxu0 %v1188
  %1521 = vmatpush.msra.mxu0 %v1147
  %1522 = vmatpush.msra.mxu0 %v1106
  %1523 = vmatpush.msra.mxu0 %v1065
  %1524 = vmatmul.f32.gmra.mxu0 %v1366
  %v1525 = vpop.f32.mrf.mxu0
  %v1526 = vadd.f32 %v1363, %v1525
  %1527 = vdwg.mxu0
  %1528 = vst [vmem:[%s9] sm:$0xff] %v1386
  %1529 = vst [vmem:[%s9 + $0x8] sm:$0xff] %v1406
  %s1530 = scalar_lea.vmem %s9, 16
  %1531 = vst [vmem:[%s1530] sm:$0xff] %v1426
  %1532 = vst [vmem:[%s1530 + $0x8] sm:$0xff] %v1446
  %s1533 = scalar_lea.vmem %s9, 32
  %1534 = vst [vmem:[%s1533] sm:$0xff] %v1466
  %1535 = vst [vmem:[%s1533 + $0x8] sm:$0xff] %v1486
  %s1536 = scalar_lea.vmem %s9, 48
  %1537 = vst [vmem:[%s1536] sm:$0xff] %v1506
  %1538 = vst [vmem:[%s1536 + $0x8] sm:$0xff] %v1526
  // Predicated region
  $region38: #{_lambda_.1} parent=0 // pred_check
    _
  $region39: #{_lambda_.1} parent=0 // pred_check_branch
    %1540 = sbr.rel (0) target = $region41
  $region40: #{_lambda_.1} parent=0 // pred_region
    _
  $region41: #{_lambda_.1} parent=0 // pred_fallthru
    _
  // Predicated region
  $region42: #{_lambda_.1} parent=0 // pred_check
    _
  $region43: #{_lambda_.1} parent=0 // pred_check_branch
    %1542 = sbr.rel (0) target = $region45
  $region44: #{_lambda_.1} parent=0 // pred_region
    _
  $region45: #{_lambda_.1} parent=0 // pred_fallthru
    _

</llo_original>
